<compile_context>
chip_gen: v5e
topology: v5e:2x2
jax: 0.10.0
libtpu: 0.0.40
codegen_flags: <defaults>
</compile_context>

<pallas_src>
import jax
import jax.numpy as jnp
from jax import lax
from jax.experimental import pallas as pl
from jax.experimental.pallas import tpu as pltpu

# ---- small synthetic NorBERT-like config ----
VOCAB = 100
MAX_POS = 16
HIDDEN = 32
HEADS = 2
HEAD_DIM = HIDDEN // HEADS
INTER = 64
LAYERS = 2
SEQ = 8
BATCH = 2
ROWS = BATCH * SEQ
LN_EPS = 1e-12
NUM_LABELS = {"sentiment": 3, "priority": 4, "category": 5}
TOTAL_LABELS = NUM_LABELS["sentiment"] + NUM_LABELS["priority"] + NUM_LABELS["category"]

# ---- packed-weight layout (row offsets are static Python ints) ----
W_LANES = 3 * HIDDEN                       # 96 lanes (widest block = wqkv)
WQKV_OFF = 0                               # (HIDDEN rows, 3*HIDDEN cols)
WO_OFF = HIDDEN                            # (HIDDEN rows, HIDDEN cols)
W1_OFF = 2 * HIDDEN                        # (HIDDEN rows, INTER cols)
W2_OFF = 3 * HIDDEN                        # (INTER rows, HIDDEN cols)
ROWS_PER_LAYER = 3 * HIDDEN + INTER        # 160
WH_BASE = LAYERS * ROWS_PER_LAYER          # fused (HIDDEN, 12) head
WBIG_ROWS = WH_BASE + HIDDEN               # 352

# ---- packed small-param layout (one param per row, zero padded to 96 lanes) ----
S_LANES = 3 * HIDDEN
S_EMB_LNG = 0
S_EMB_LNB = 1
S_LAYER_BASE = 2
S_PER_LAYER = 8   # bqkv, bo, ln1g, ln1b, b1, b2, ln2g, ln2b
S_BH = S_LAYER_BASE + LAYERS * S_PER_LAYER
SMALL_ROWS = S_BH + 1

DATA_LANES = HIDDEN + ROWS                 # [x2d | mask2d] packed along lanes


# ---------------- in-kernel math helpers ----------------
def _layernorm(x, g, b):
    mu = jnp.mean(x, axis=-1, keepdims=True)
    var = jnp.mean(jnp.square(x - mu), axis=-1, keepdims=True)
    return (x - mu) * lax.rsqrt(var + LN_EPS) * g + b


def _gelu(x):
    # tanh approximation of GELU (EUP tanh); exact erf variant differs by <1e-3
    return 0.5 * x * (1.0 + jnp.tanh(0.7978845608028654 * (x + 0.044715 * x * x * x)))


def _softmax(s):
    s = s - jnp.max(s, axis=-1, keepdims=True)
    p = jnp.exp(s)
    return p * pl.reciprocal(jnp.sum(p, axis=-1, keepdims=True), approx=True)


def _mm(a, b):
    # (M,K) @ (K,N), bf16 operands, f32 accumulate
    return lax.dot_general(a.astype(jnp.bfloat16), b.astype(jnp.bfloat16),
                           (((1,), (0,)), ((), ())),
                           preferred_element_type=jnp.float32)


def _mm_nt(a, b):
    # (M,K) @ (N,K)^T (contract last dims), bf16 operands, f32 accumulate
    return lax.dot_general(a.astype(jnp.bfloat16), b.astype(jnp.bfloat16),
                           (((1,), (1,)), ((), ())),
                           preferred_element_type=jnp.float32)


# ---------------- fully fused forward kernel ----------------
def fused_forward_kernel(data_ref, wbig_ref, small_ref, out_ref):
    # data_ref: (B*S, HIDDEN + B*S) = [raw embedding sums | block-diag additive mask]
    x_raw = data_ref[:, :HIDDEN]                      # (ROWS, H) f32
    mask = data_ref[:, HIDDEN:HIDDEN + ROWS]          # (ROWS, ROWS) f32 additive

    x = _layernorm(x_raw,
                   small_ref[S_EMB_LNG:S_EMB_LNG + 1, :HIDDEN],
                   small_ref[S_EMB_LNB:S_EMB_LNB + 1, :HIDDEN])
    scale = 1.0 / (HEAD_DIM ** 0.5)

    for l in range(LAYERS):                           # static in-kernel layer loop
        wbase = l * ROWS_PER_LAYER
        sbase = S_LAYER_BASE + l * S_PER_LAYER

        wqkv = wbig_ref[wbase + WQKV_OFF:wbase + WQKV_OFF + HIDDEN, :]          # (32, 96) bf16
        wo = wbig_ref[wbase + WO_OFF:wbase + WO_OFF + HIDDEN, :HIDDEN]          # (32, 32)
        w1 = wbig_ref[wbase + W1_OFF:wbase + W1_OFF + HIDDEN, :INTER]           # (32, 64)
        w2 = wbig_ref[wbase + W2_OFF:wbase + W2_OFF + INTER, :HIDDEN]           # (64, 32)

        bqkv = small_ref[sbase + 0:sbase + 1, :3 * HIDDEN]
        bo = small_ref[sbase + 1:sbase + 2, :HIDDEN]
        ln1g = small_ref[sbase + 2:sbase + 3, :HIDDEN]
        ln1b = small_ref[sbase + 3:sbase + 4, :HIDDEN]
        b1 = small_ref[sbase + 4:sbase + 5, :INTER]
        b2 = small_ref[sbase + 5:sbase + 6, :HIDDEN]
        ln2g = small_ref[sbase + 6:sbase + 7, :HIDDEN]
        ln2b = small_ref[sbase + 7:sbase + 8, :HIDDEN]

        # ---- fused QKV: one (ROWS,H)@(H,3H) matmul per layer ----
        qkv = _mm(x, wqkv) + bqkv                     # (ROWS, 96)

        # ---- block-diagonal batched attention (whole folded batch at once) ----
        ctx_heads = []
        for h in range(HEADS):                        # tiny static head loop
            qh = qkv[:, h * HEAD_DIM:(h + 1) * HEAD_DIM]                        # (ROWS, dh)
            kh = qkv[:, HIDDEN + h * HEAD_DIM:HIDDEN + (h + 1) * HEAD_DIM]
            vh = qkv[:, 2 * HIDDEN + h * HEAD_DIM:2 * HIDDEN + (h + 1) * HEAD_DIM]
            s = _mm_nt(qh, kh) * scale + mask         # (ROWS, ROWS)
            p = _softmax(s)
            ctx_heads.append(_mm(p, vh))              # (ROWS, dh)
        ctx = jnp.concatenate(ctx_heads, axis=1)      # (ROWS, H), lane concat

        # ---- fused output projection: one (ROWS,H)@(H,H) matmul ----
        attn = _mm(ctx, wo) + bo
        y = _layernorm(x + attn, ln1g, ln1b)

        # ---- feed-forward ----
        h1 = _gelu(_mm(y, w1) + b1)
        h2 = _mm(h1, w2) + b2
        x = _layernorm(y + h2, ln2g, ln2b)

    # ---- fused (H, 12) classification head for ALL rows (CLS sliced outside) ----
    wh = wbig_ref[WH_BASE:WH_BASE + HIDDEN, :TOTAL_LABELS]
    bh = small_ref[S_BH:S_BH + 1, :TOTAL_LABELS]
    out_ref[...] = _mm(x, wh) + bh


def _full(shape):
    nd = len(shape)
    return pl.BlockSpec(shape, lambda i, nd=nd: (0,) * nd)


def fused_forward(data, wbig, small):
    return pl.pallas_call(
        fused_forward_kernel,
        out_shape=jax.ShapeDtypeStruct((ROWS, TOTAL_LABELS), jnp.float32),
        grid=(1,),
        in_specs=[_full(data.shape), _full(wbig.shape), _full(small.shape)],
        out_specs=_full((ROWS, TOTAL_LABELS)),
        compiler_params=pltpu.CompilerParams(
            dimension_semantics=("arbitrary",)),      # single step; no megacore split
    )(data, wbig, small)


# ---------------- deterministic parameter init (torch-module-like layout) ----------------
def init_params(key):
    keys = iter(jax.random.split(key, 32))

    def dense(*shape):
        return jax.random.normal(next(keys), shape, jnp.float32) * 0.02

    return {
        "word_emb": dense(VOCAB, HIDDEN),
        "pos_emb": dense(MAX_POS, HIDDEN),
        "type_emb": dense(2, HIDDEN),
        "emb_lng": jnp.ones((HIDDEN,), jnp.float32),
        "emb_lnb": jnp.zeros((HIDDEN,), jnp.float32),
        "wq": dense(LAYERS, HIDDEN, HIDDEN),
        "bq": jnp.zeros((LAYERS, HIDDEN), jnp.float32),
        "wk": dense(LAYERS, HIDDEN, HIDDEN),
        "bk": jnp.zeros((LAYERS, HIDDEN), jnp.float32),
        "wv": dense(LAYERS, HIDDEN, HIDDEN),
        "bv": jnp.zeros((LAYERS, HIDDEN), jnp.float32),
        "wo": dense(LAYERS, HIDDEN, HIDDEN),
        "bo": jnp.zeros((LAYERS, HIDDEN), jnp.float32),
        "ln1g": jnp.ones((LAYERS, HIDDEN), jnp.float32),
        "ln1b": jnp.zeros((LAYERS, HIDDEN), jnp.float32),
        "w1": dense(LAYERS, HIDDEN, INTER),
        "b1": jnp.zeros((LAYERS, INTER), jnp.float32),
        "w2": dense(LAYERS, INTER, HIDDEN),
        "b2": jnp.zeros((LAYERS, HIDDEN), jnp.float32),
        "ln2g": jnp.ones((LAYERS, HIDDEN), jnp.float32),
        "ln2b": jnp.zeros((LAYERS, HIDDEN), jnp.float32),
        # three heads fused: [sentiment | priority | category] along out-features
        "wh": dense(HIDDEN, TOTAL_LABELS),
        "bh": jnp.zeros((TOTAL_LABELS,), jnp.float32),
    }


def pack_params(p):
    """Pack all kernel-side parameters into 2 blobs: bf16 matmul weights + f32 small params."""
    wbig = jnp.zeros((WBIG_ROWS, W_LANES), jnp.float32)
    for l in range(LAYERS):
        base = l * ROWS_PER_LAYER
        wqkv = jnp.concatenate([p["wq"][l], p["wk"][l], p["wv"][l]], axis=1)   # (H, 3H)
        wbig = wbig.at[base + WQKV_OFF:base + WQKV_OFF + HIDDEN, :].set(wqkv)
        wbig = wbig.at[base + WO_OFF:base + WO_OFF + HIDDEN, :HIDDEN].set(p["wo"][l])
        wbig = wbig.at[base + W1_OFF:base + W1_OFF + HIDDEN, :INTER].set(p["w1"][l])
        wbig = wbig.at[base + W2_OFF:base + W2_OFF + INTER, :HIDDEN].set(p["w2"][l])
    wbig = wbig.at[WH_BASE:WH_BASE + HIDDEN, :TOTAL_LABELS].set(p["wh"])
    wbig = wbig.astype(jnp.bfloat16)

    small = jnp.zeros((SMALL_ROWS, S_LANES), jnp.float32)
    small = small.at[S_EMB_LNG, :HIDDEN].set(p["emb_lng"])
    small = small.at[S_EMB_LNB, :HIDDEN].set(p["emb_lnb"])
    for l in range(LAYERS):
        sbase = S_LAYER_BASE + l * S_PER_LAYER
        bqkv = jnp.concatenate([p["bq"][l], p["bk"][l], p["bv"][l]], axis=0)   # (3H,)
        small = small.at[sbase + 0, :3 * HIDDEN].set(bqkv)
        small = small.at[sbase + 1, :HIDDEN].set(p["bo"][l])
        small = small.at[sbase + 2, :HIDDEN].set(p["ln1g"][l])
        small = small.at[sbase + 3, :HIDDEN].set(p["ln1b"][l])
        small = small.at[sbase + 4, :INTER].set(p["b1"][l])
        small = small.at[sbase + 5, :HIDDEN].set(p["b2"][l])
        small = small.at[sbase + 6, :HIDDEN].set(p["ln2g"][l])
        small = small.at[sbase + 7, :HIDDEN].set(p["ln2b"][l])
    small = small.at[S_BH, :TOTAL_LABELS].set(p["bh"])
    return wbig, small


# ---------------- full forward (MultiHeadNorBERT.forward) ----------------
def multihead_norbert_forward(params, wbig, small, input_ids, attention_mask):
    B, S = input_ids.shape
    # embeddings: gather + adds are glue; everything else runs in the fused kernel
    emb = (jnp.take(params["word_emb"], input_ids, axis=0)
           + params["pos_emb"][:S][None, :, :]
           + params["type_emb"][0][None, None, :])
    x2d = emb.reshape(B * S, HIDDEN)

    # block-diagonal additive mask for batch-folded attention:
    #   0 where (same batch & key attended), -1e9 otherwise
    batch_ids = jnp.repeat(jnp.arange(B), S)
    same_batch = batch_ids[:, None] == batch_ids[None, :]               # (B*S, B*S)
    key_pad_add = ((1.0 - attention_mask.astype(jnp.float32)) * -1e9).reshape(B * S)
    mask2d = jnp.where(same_batch, key_pad_add[None, :], -1e9)          # (B*S, B*S)

    data = jnp.concatenate([x2d, mask2d], axis=1)                       # (B*S, H + B*S)

    logits_all = fused_forward(data, wbig, small)                       # (B*S, 12)
    logits = logits_all[::S]                                            # [CLS] rows -> (B, 12)

    ns = NUM_LABELS["sentiment"]
    npr = NUM_LABELS["priority"]
    nc = NUM_LABELS["category"]
    # dropout(p=0.3): identity in eval mode
    return {
        "sentiment": logits[:, :ns],
        "priority": logits[:, ns:ns + npr],
        "category": logits[:, ns + npr:ns + npr + nc],
    }


if __name__ == "__main__":
    key = jax.random.PRNGKey(0)
    k_par, k_ids = jax.random.split(key)
    params = init_params(k_par)
    wbig, small = pack_params(params)

    input_ids = jax.random.randint(k_ids, (BATCH, SEQ), 0, VOCAB, dtype=jnp.int32)
    attention_mask = jnp.ones((BATCH, SEQ), jnp.int32)
    attention_mask = attention_mask.at[1, -2:].set(0)   # some padding in batch row 1

    out = multihead_norbert_forward(params, wbig, small, input_ids, attention_mask)
    jax.block_until_ready(out)

    assert out["sentiment"].shape == (BATCH, NUM_LABELS["sentiment"])
    assert out["priority"].shape == (BATCH, NUM_LABELS["priority"])
    assert out["category"].shape == (BATCH, NUM_LABELS["category"])
    print("KERNEL_OK")
</pallas_src>

<mosaic_0001>
module attributes {stable_mosaic.version = 11 : i64} {
  func.func @fused_forward_kernel(%arg0: i32, %arg1: memref<16x48xf32, #tpu.memory_space<vmem>>, %arg2: memref<352x96xbf16, #tpu.memory_space<vmem>>, %arg3: memref<19x96xf32, #tpu.memory_space<vmem>>, %arg4: memref<16x12xf32, #tpu.memory_space<vmem>>) attributes {dimension_semantics = [#tpu.dimension_semantics<arbitrary>], iteration_bounds = array<i64: 1>, scalar_prefetch = 0 : i64, scratch_operands = 0 : i64, tpu.core_type = #tpu.core_type<tc>, window_params = [{pipeline_mode = #tpu.pipeline_mode<synchronous>, transform_indices = @transform_0, window_bounds = array<i64: 16, 48>}, {pipeline_mode = #tpu.pipeline_mode<synchronous>, transform_indices = @transform_1, window_bounds = array<i64: 352, 96>}, {pipeline_mode = #tpu.pipeline_mode<synchronous>, transform_indices = @transform_2, window_bounds = array<i64: 19, 96>}, {pipeline_mode = #tpu.pipeline_mode<synchronous>, transform_indices = @transform_3, window_bounds = array<i64: 16, 12>}]} {
    %c0 = arith.constant 0 : index
    %c0_0 = arith.constant 0 : index
    %0 = vector.load %arg1[%c0, %c0_0] : memref<16x48xf32, #tpu.memory_space<vmem>>, vector<16x32xf32>
    %c0_1 = arith.constant 0 : index
    %c32 = arith.constant 32 : index
    %1 = vector.load %arg1[%c0_1, %c32] : memref<16x48xf32, #tpu.memory_space<vmem>>, vector<16x16xf32>
    %c0_2 = arith.constant 0 : index
    %c0_3 = arith.constant 0 : index
    %2 = vector.load %arg3[%c0_2, %c0_3] : memref<19x96xf32, #tpu.memory_space<vmem>>, vector<1x32xf32>
    %c1 = arith.constant 1 : index
    %c0_4 = arith.constant 0 : index
    %3 = vector.load %arg3[%c1, %c0_4] : memref<19x96xf32, #tpu.memory_space<vmem>>, vector<1x32xf32>
    %cst = arith.constant dense<0.000000e+00> : vector<16xf32>
    %4 = vector.multi_reduction <add>, %0, %cst [1] : vector<16x32xf32> to vector<16xf32>
    %5 = vector.shape_cast %4 : vector<16xf32> to vector<16x1xf32>
    %cst_5 = arith.constant 3.200000e+01 : f32
    %6 = vector.broadcast %cst_5 : f32 to vector<16x1xf32>
    %7 = arith.divf %5, %6 : vector<16x1xf32>
    %8 = vector.broadcast %7 : vector<16x1xf32> to vector<16x32xf32>
    %9 = arith.subf %0, %8 : vector<16x32xf32>
    %10 = arith.mulf %9, %9 : vector<16x32xf32>
    %cst_6 = arith.constant dense<0.000000e+00> : vector<16xf32>
    %11 = vector.multi_reduction <add>, %10, %cst_6 [1] : vector<16x32xf32> to vector<16xf32>
    %12 = vector.shape_cast %11 : vector<16xf32> to vector<16x1xf32>
    %cst_7 = arith.constant 3.200000e+01 : f32
    %13 = vector.broadcast %cst_7 : f32 to vector<16x1xf32>
    %14 = arith.divf %12, %13 : vector<16x1xf32>
    %15 = vector.broadcast %7 : vector<16x1xf32> to vector<16x32xf32>
    %16 = arith.subf %0, %15 : vector<16x32xf32>
    %cst_8 = arith.constant 9.99999996E-13 : f32
    %17 = vector.broadcast %cst_8 : f32 to vector<16x1xf32>
    %18 = arith.addf %14, %17 : vector<16x1xf32>
    %19 = math.rsqrt %18 : vector<16x1xf32>
    %20 = vector.broadcast %19 : vector<16x1xf32> to vector<16x32xf32>
    %21 = arith.mulf %16, %20 : vector<16x32xf32>
    %22 = vector.broadcast %2 : vector<1x32xf32> to vector<16x32xf32>
    %23 = arith.mulf %21, %22 : vector<16x32xf32>
    %24 = vector.broadcast %3 : vector<1x32xf32> to vector<16x32xf32>
    %25 = arith.addf %23, %24 : vector<16x32xf32>
    %c0_9 = arith.constant 0 : index
    %c0_10 = arith.constant 0 : index
    %26 = vector.load %arg2[%c0_9, %c0_10] : memref<352x96xbf16, #tpu.memory_space<vmem>>, vector<32x96xbf16>
    %c32_11 = arith.constant 32 : index
    %c0_12 = arith.constant 0 : index
    %27 = vector.load %arg2[%c32_11, %c0_12] : memref<352x96xbf16, #tpu.memory_space<vmem>>, vector<32x32xbf16>
    %c64 = arith.constant 64 : index
    %c0_13 = arith.constant 0 : index
    %28 = vector.load %arg2[%c64, %c0_13] : memref<352x96xbf16, #tpu.memory_space<vmem>>, vector<32x64xbf16>
    %c96 = arith.constant 96 : index
    %c0_14 = arith.constant 0 : index
    %29 = vector.load %arg2[%c96, %c0_14] : memref<352x96xbf16, #tpu.memory_space<vmem>>, vector<64x32xbf16>
    %c2 = arith.constant 2 : index
    %c0_15 = arith.constant 0 : index
    %30 = vector.load %arg3[%c2, %c0_15] : memref<19x96xf32, #tpu.memory_space<vmem>>, vector<1x96xf32>
    %c3 = arith.constant 3 : index
    %c0_16 = arith.constant 0 : index
    %31 = vector.load %arg3[%c3, %c0_16] : memref<19x96xf32, #tpu.memory_space<vmem>>, vector<1x32xf32>
    %c4 = arith.constant 4 : index
    %c0_17 = arith.constant 0 : index
    %32 = vector.load %arg3[%c4, %c0_17] : memref<19x96xf32, #tpu.memory_space<vmem>>, vector<1x32xf32>
    %c5 = arith.constant 5 : index
    %c0_18 = arith.constant 0 : index
    %33 = vector.load %arg3[%c5, %c0_18] : memref<19x96xf32, #tpu.memory_space<vmem>>, vector<1x32xf32>
    %c6 = arith.constant 6 : index
    %c0_19 = arith.constant 0 : index
    %34 = vector.load %arg3[%c6, %c0_19] : memref<19x96xf32, #tpu.memory_space<vmem>>, vector<1x64xf32>
    %c7 = arith.constant 7 : index
    %c0_20 = arith.constant 0 : index
    %35 = vector.load %arg3[%c7, %c0_20] : memref<19x96xf32, #tpu.memory_space<vmem>>, vector<1x32xf32>
    %c8 = arith.constant 8 : index
    %c0_21 = arith.constant 0 : index
    %36 = vector.load %arg3[%c8, %c0_21] : memref<19x96xf32, #tpu.memory_space<vmem>>, vector<1x32xf32>
    %c9 = arith.constant 9 : index
    %c0_22 = arith.constant 0 : index
    %37 = vector.load %arg3[%c9, %c0_22] : memref<19x96xf32, #tpu.memory_space<vmem>>, vector<1x32xf32>
    %38 = arith.truncf %25 : vector<16x32xf32> to vector<16x32xbf16>
    %cst_23 = arith.constant dense<0.000000e+00> : vector<16x96xf32>
    %39 = tpu.matmul %38, %26, %cst_23 {dimension_numbers = #tpu.dot_dimension_numbers<[1], [0], [0], [1], [0, 0, 1, 1], [], []>} : vector<16x32xbf16>, vector<32x96xbf16>, vector<16x96xf32> -> vector<16x96xf32>
    %40 = vector.broadcast %30 : vector<1x96xf32> to vector<16x96xf32>
    %41 = arith.addf %39, %40 : vector<16x96xf32>
    %42 = vector.extract_strided_slice %41 {offsets = [0, 0], sizes = [16, 16], strides = [1, 1]} : vector<16x96xf32> to vector<16x16xf32>
    %43 = vector.extract_strided_slice %41 {offsets = [0, 32], sizes = [16, 16], strides = [1, 1]} : vector<16x96xf32> to vector<16x16xf32>
    %44 = vector.extract_strided_slice %41 {offsets = [0, 64], sizes = [16, 16], strides = [1, 1]} : vector<16x96xf32> to vector<16x16xf32>
    %45 = arith.truncf %42 : vector<16x16xf32> to vector<16x16xbf16>
    %46 = arith.truncf %43 : vector<16x16xf32> to vector<16x16xbf16>
    %cst_24 = arith.constant dense<0.000000e+00> : vector<16x16xf32>
    %47 = tpu.matmul %45, %46, %cst_24 {dimension_numbers = #tpu.dot_dimension_numbers<[1], [1], [0], [0], [0, 0, 1, 0], [], []>} : vector<16x16xbf16>, vector<16x16xbf16>, vector<16x16xf32> -> vector<16x16xf32>
    %cst_25 = arith.constant 2.500000e-01 : f32
    %48 = vector.broadcast %cst_25 : f32 to vector<16x16xf32>
    %49 = arith.mulf %47, %48 : vector<16x16xf32>
    %50 = arith.addf %49, %1 : vector<16x16xf32>
    %cst_26 = arith.constant dense<0xFF800000> : vector<16xf32>
    %51 = vector.multi_reduction <maximumf>, %50, %cst_26 [1] : vector<16x16xf32> to vector<16xf32>
    %52 = vector.shape_cast %51 : vector<16xf32> to vector<16x1xf32>
    %53 = vector.broadcast %52 : vector<16x1xf32> to vector<16x16xf32>
    %54 = arith.subf %50, %53 : vector<16x16xf32>
    %55 = math.exp %54 : vector<16x16xf32>
    %cst_27 = arith.constant dense<0.000000e+00> : vector<16xf32>
    %56 = vector.multi_reduction <add>, %55, %cst_27 [1] : vector<16x16xf32> to vector<16xf32>
    %57 = vector.shape_cast %56 : vector<16xf32> to vector<16x1xf32>
    %58 = tpu.reciprocal %57 {approx = true} : vector<16x1xf32> -> vector<16x1xf32>
    %59 = vector.broadcast %58 : vector<16x1xf32> to vector<16x16xf32>
    %60 = arith.mulf %55, %59 : vector<16x16xf32>
    %61 = arith.truncf %60 : vector<16x16xf32> to vector<16x16xbf16>
    %62 = arith.truncf %44 : vector<16x16xf32> to vector<16x16xbf16>
    %cst_28 = arith.constant dense<0.000000e+00> : vector<16x16xf32>
    %63 = tpu.matmul %61, %62, %cst_28 {dimension_numbers = #tpu.dot_dimension_numbers<[1], [0], [0], [1], [0, 0, 1, 1], [], []>} : vector<16x16xbf16>, vector<16x16xbf16>, vector<16x16xf32> -> vector<16x16xf32>
    %64 = vector.extract_strided_slice %41 {offsets = [0, 16], sizes = [16, 16], strides = [1, 1]} : vector<16x96xf32> to vector<16x16xf32>
    %65 = vector.extract_strided_slice %41 {offsets = [0, 48], sizes = [16, 16], strides = [1, 1]} : vector<16x96xf32> to vector<16x16xf32>
    %66 = vector.extract_strided_slice %41 {offsets = [0, 80], sizes = [16, 16], strides = [1, 1]} : vector<16x96xf32> to vector<16x16xf32>
    %67 = arith.truncf %64 : vector<16x16xf32> to vector<16x16xbf16>
    %68 = arith.truncf %65 : vector<16x16xf32> to vector<16x16xbf16>
    %cst_29 = arith.constant dense<0.000000e+00> : vector<16x16xf32>
    %69 = tpu.matmul %67, %68, %cst_29 {dimension_numbers = #tpu.dot_dimension_numbers<[1], [1], [0], [0], [0, 0, 1, 0], [], []>} : vector<16x16xbf16>, vector<16x16xbf16>, vector<16x16xf32> -> vector<16x16xf32>
    %cst_30 = arith.constant 2.500000e-01 : f32
    %70 = vector.broadcast %cst_30 : f32 to vector<16x16xf32>
    %71 = arith.mulf %69, %70 : vector<16x16xf32>
    %72 = arith.addf %71, %1 : vector<16x16xf32>
    %cst_31 = arith.constant dense<0xFF800000> : vector<16xf32>
    %73 = vector.multi_reduction <maximumf>, %72, %cst_31 [1] : vector<16x16xf32> to vector<16xf32>
    %74 = vector.shape_cast %73 : vector<16xf32> to vector<16x1xf32>
    %75 = vector.broadcast %74 : vector<16x1xf32> to vector<16x16xf32>
    %76 = arith.subf %72, %75 : vector<16x16xf32>
    %77 = math.exp %76 : vector<16x16xf32>
    %cst_32 = arith.constant dense<0.000000e+00> : vector<16xf32>
    %78 = vector.multi_reduction <add>, %77, %cst_32 [1] : vector<16x16xf32> to vector<16xf32>
    %79 = vector.shape_cast %78 : vector<16xf32> to vector<16x1xf32>
    %80 = tpu.reciprocal %79 {approx = true} : vector<16x1xf32> -> vector<16x1xf32>
    %81 = vector.broadcast %80 : vector<16x1xf32> to vector<16x16xf32>
    %82 = arith.mulf %77, %81 : vector<16x16xf32>
    %83 = arith.truncf %82 : vector<16x16xf32> to vector<16x16xbf16>
    %84 = arith.truncf %66 : vector<16x16xf32> to vector<16x16xbf16>
    %cst_33 = arith.constant dense<0.000000e+00> : vector<16x16xf32>
    %85 = tpu.matmul %83, %84, %cst_33 {dimension_numbers = #tpu.dot_dimension_numbers<[1], [0], [0], [1], [0, 0, 1, 1], [], []>} : vector<16x16xbf16>, vector<16x16xbf16>, vector<16x16xf32> -> vector<16x16xf32>
    %86 = tpu.concatenate %63, %85 in 1 : vector<16x16xf32>, vector<16x16xf32> -> vector<16x32xf32>
    %87 = arith.truncf %86 : vector<16x32xf32> to vector<16x32xbf16>
    %cst_34 = arith.constant dense<0.000000e+00> : vector<16x32xf32>
    %88 = tpu.matmul %87, %27, %cst_34 {dimension_numbers = #tpu.dot_dimension_numbers<[1], [0], [0], [1], [0, 0, 1, 1], [], []>} : vector<16x32xbf16>, vector<32x32xbf16>, vector<16x32xf32> -> vector<16x32xf32>
    %89 = vector.broadcast %31 : vector<1x32xf32> to vector<16x32xf32>
    %90 = arith.addf %88, %89 : vector<16x32xf32>
    %91 = arith.addf %25, %90 : vector<16x32xf32>
    %cst_35 = arith.constant dense<0.000000e+00> : vector<16xf32>
    %92 = vector.multi_reduction <add>, %91, %cst_35 [1] : vector<16x32xf32> to vector<16xf32>
    %93 = vector.shape_cast %92 : vector<16xf32> to vector<16x1xf32>
    %cst_36 = arith.constant 3.200000e+01 : f32
    %94 = vector.broadcast %cst_36 : f32 to vector<16x1xf32>
    %95 = arith.divf %93, %94 : vector<16x1xf32>
    %96 = vector.broadcast %95 : vector<16x1xf32> to vector<16x32xf32>
    %97 = arith.subf %91, %96 : vector<16x32xf32>
    %98 = arith.mulf %97, %97 : vector<16x32xf32>
    %cst_37 = arith.constant dense<0.000000e+00> : vector<16xf32>
    %99 = vector.multi_reduction <add>, %98, %cst_37 [1] : vector<16x32xf32> to vector<16xf32>
    %100 = vector.shape_cast %99 : vector<16xf32> to vector<16x1xf32>
    %cst_38 = arith.constant 3.200000e+01 : f32
    %101 = vector.broadcast %cst_38 : f32 to vector<16x1xf32>
    %102 = arith.divf %100, %101 : vector<16x1xf32>
    %103 = vector.broadcast %95 : vector<16x1xf32> to vector<16x32xf32>
    %104 = arith.subf %91, %103 : vector<16x32xf32>
    %cst_39 = arith.constant 9.99999996E-13 : f32
    %105 = vector.broadcast %cst_39 : f32 to vector<16x1xf32>
    %106 = arith.addf %102, %105 : vector<16x1xf32>
    %107 = math.rsqrt %106 : vector<16x1xf32>
    %108 = vector.broadcast %107 : vector<16x1xf32> to vector<16x32xf32>
    %109 = arith.mulf %104, %108 : vector<16x32xf32>
    %110 = vector.broadcast %32 : vector<1x32xf32> to vector<16x32xf32>
    %111 = arith.mulf %109, %110 : vector<16x32xf32>
    %112 = vector.broadcast %33 : vector<1x32xf32> to vector<16x32xf32>
    %113 = arith.addf %111, %112 : vector<16x32xf32>
    %114 = arith.truncf %113 : vector<16x32xf32> to vector<16x32xbf16>
    %cst_40 = arith.constant dense<0.000000e+00> : vector<16x64xf32>
    %115 = tpu.matmul %114, %28, %cst_40 {dimension_numbers = #tpu.dot_dimension_numbers<[1], [0], [0], [1], [0, 0, 1, 1], [], []>} : vector<16x32xbf16>, vector<32x64xbf16>, vector<16x64xf32> -> vector<16x64xf32>
    %116 = vector.broadcast %34 : vector<1x64xf32> to vector<16x64xf32>
    %117 = arith.addf %115, %116 : vector<16x64xf32>
    %cst_41 = arith.constant 5.000000e-01 : f32
    %118 = vector.broadcast %cst_41 : f32 to vector<16x64xf32>
    %119 = arith.mulf %118, %117 : vector<16x64xf32>
    %cst_42 = arith.constant 4.471500e-02 : f32
    %120 = vector.broadcast %cst_42 : f32 to vector<16x64xf32>
    %121 = arith.mulf %120, %117 : vector<16x64xf32>
    %122 = arith.mulf %121, %117 : vector<16x64xf32>
    %123 = arith.mulf %122, %117 : vector<16x64xf32>
    %124 = arith.addf %117, %123 : vector<16x64xf32>
    %cst_43 = arith.constant 0.797884583 : f32
    %125 = vector.broadcast %cst_43 : f32 to vector<16x64xf32>
    %126 = arith.mulf %125, %124 : vector<16x64xf32>
    %127 = math.tanh %126 : vector<16x64xf32>
    %cst_44 = arith.constant 1.000000e+00 : f32
    %128 = vector.broadcast %cst_44 : f32 to vector<16x64xf32>
    %129 = arith.addf %128, %127 : vector<16x64xf32>
    %130 = arith.mulf %119, %129 : vector<16x64xf32>
    %131 = arith.truncf %130 : vector<16x64xf32> to vector<16x64xbf16>
    %cst_45 = arith.constant dense<0.000000e+00> : vector<16x32xf32>
    %132 = tpu.matmul %131, %29, %cst_45 {dimension_numbers = #tpu.dot_dimension_numbers<[1], [0], [0], [1], [0, 0, 1, 1], [], []>} : vector<16x64xbf16>, vector<64x32xbf16>, vector<16x32xf32> -> vector<16x32xf32>
    %133 = vector.broadcast %35 : vector<1x32xf32> to vector<16x32xf32>
    %134 = arith.addf %132, %133 : vector<16x32xf32>
    %135 = arith.addf %113, %134 : vector<16x32xf32>
    %cst_46 = arith.constant dense<0.000000e+00> : vector<16xf32>
    %136 = vector.multi_reduction <add>, %135, %cst_46 [1] : vector<16x32xf32> to vector<16xf32>
    %137 = vector.shape_cast %136 : vector<16xf32> to vector<16x1xf32>
    %cst_47 = arith.constant 3.200000e+01 : f32
    %138 = vector.broadcast %cst_47 : f32 to vector<16x1xf32>
    %139 = arith.divf %137, %138 : vector<16x1xf32>
    %140 = vector.broadcast %139 : vector<16x1xf32> to vector<16x32xf32>
    %141 = arith.subf %135, %140 : vector<16x32xf32>
    %142 = arith.mulf %141, %141 : vector<16x32xf32>
    %cst_48 = arith.constant dense<0.000000e+00> : vector<16xf32>
    %143 = vector.multi_reduction <add>, %142, %cst_48 [1] : vector<16x32xf32> to vector<16xf32>
    %144 = vector.shape_cast %143 : vector<16xf32> to vector<16x1xf32>
    %cst_49 = arith.constant 3.200000e+01 : f32
    %145 = vector.broadcast %cst_49 : f32 to vector<16x1xf32>
    %146 = arith.divf %144, %145 : vector<16x1xf32>
    %147 = vector.broadcast %139 : vector<16x1xf32> to vector<16x32xf32>
    %148 = arith.subf %135, %147 : vector<16x32xf32>
    %cst_50 = arith.constant 9.99999996E-13 : f32
    %149 = vector.broadcast %cst_50 : f32 to vector<16x1xf32>
    %150 = arith.addf %146, %149 : vector<16x1xf32>
    %151 = math.rsqrt %150 : vector<16x1xf32>
    %152 = vector.broadcast %151 : vector<16x1xf32> to vector<16x32xf32>
    %153 = arith.mulf %148, %152 : vector<16x32xf32>
    %154 = vector.broadcast %36 : vector<1x32xf32> to vector<16x32xf32>
    %155 = arith.mulf %153, %154 : vector<16x32xf32>
    %156 = vector.broadcast %37 : vector<1x32xf32> to vector<16x32xf32>
    %157 = arith.addf %155, %156 : vector<16x32xf32>
    %c160 = arith.constant 160 : index
    %c0_51 = arith.constant 0 : index
    %158 = vector.load %arg2[%c160, %c0_51] : memref<352x96xbf16, #tpu.memory_space<vmem>>, vector<32x96xbf16>
    %c192 = arith.constant 192 : index
    %c0_52 = arith.constant 0 : index
    %159 = vector.load %arg2[%c192, %c0_52] : memref<352x96xbf16, #tpu.memory_space<vmem>>, vector<32x32xbf16>
    %c224 = arith.constant 224 : index
    %c0_53 = arith.constant 0 : index
    %160 = vector.load %arg2[%c224, %c0_53] : memref<352x96xbf16, #tpu.memory_space<vmem>>, vector<32x64xbf16>
    %c256 = arith.constant 256 : index
    %c0_54 = arith.constant 0 : index
    %161 = vector.load %arg2[%c256, %c0_54] : memref<352x96xbf16, #tpu.memory_space<vmem>>, vector<64x32xbf16>
    %c10 = arith.constant 10 : index
    %c0_55 = arith.constant 0 : index
    %162 = vector.load %arg3[%c10, %c0_55] : memref<19x96xf32, #tpu.memory_space<vmem>>, vector<1x96xf32>
    %c11 = arith.constant 11 : index
    %c0_56 = arith.constant 0 : index
    %163 = vector.load %arg3[%c11, %c0_56] : memref<19x96xf32, #tpu.memory_space<vmem>>, vector<1x32xf32>
    %c12 = arith.constant 12 : index
    %c0_57 = arith.constant 0 : index
    %164 = vector.load %arg3[%c12, %c0_57] : memref<19x96xf32, #tpu.memory_space<vmem>>, vector<1x32xf32>
    %c13 = arith.constant 13 : index
    %c0_58 = arith.constant 0 : index
    %165 = vector.load %arg3[%c13, %c0_58] : memref<19x96xf32, #tpu.memory_space<vmem>>, vector<1x32xf32>
    %c14 = arith.constant 14 : index
    %c0_59 = arith.constant 0 : index
    %166 = vector.load %arg3[%c14, %c0_59] : memref<19x96xf32, #tpu.memory_space<vmem>>, vector<1x64xf32>
    %c15 = arith.constant 15 : index
    %c0_60 = arith.constant 0 : index
    %167 = vector.load %arg3[%c15, %c0_60] : memref<19x96xf32, #tpu.memory_space<vmem>>, vector<1x32xf32>
    %c16 = arith.constant 16 : index
    %c0_61 = arith.constant 0 : index
    %168 = vector.load %arg3[%c16, %c0_61] : memref<19x96xf32, #tpu.memory_space<vmem>>, vector<1x32xf32>
    %c17 = arith.constant 17 : index
    %c0_62 = arith.constant 0 : index
    %169 = vector.load %arg3[%c17, %c0_62] : memref<19x96xf32, #tpu.memory_space<vmem>>, vector<1x32xf32>
    %170 = arith.truncf %157 : vector<16x32xf32> to vector<16x32xbf16>
    %cst_63 = arith.constant dense<0.000000e+00> : vector<16x96xf32>
    %171 = tpu.matmul %170, %158, %cst_63 {dimension_numbers = #tpu.dot_dimension_numbers<[1], [0], [0], [1], [0, 0, 1, 1], [], []>} : vector<16x32xbf16>, vector<32x96xbf16>, vector<16x96xf32> -> vector<16x96xf32>
    %172 = vector.broadcast %162 : vector<1x96xf32> to vector<16x96xf32>
    %173 = arith.addf %171, %172 : vector<16x96xf32>
    %174 = vector.extract_strided_slice %173 {offsets = [0, 0], sizes = [16, 16], strides = [1, 1]} : vector<16x96xf32> to vector<16x16xf32>
    %175 = vector.extract_strided_slice %173 {offsets = [0, 32], sizes = [16, 16], strides = [1, 1]} : vector<16x96xf32> to vector<16x16xf32>
    %176 = vector.extract_strided_slice %173 {offsets = [0, 64], sizes = [16, 16], strides = [1, 1]} : vector<16x96xf32> to vector<16x16xf32>
    %177 = arith.truncf %174 : vector<16x16xf32> to vector<16x16xbf16>
    %178 = arith.truncf %175 : vector<16x16xf32> to vector<16x16xbf16>
    %cst_64 = arith.constant dense<0.000000e+00> : vector<16x16xf32>
    %179 = tpu.matmul %177, %178, %cst_64 {dimension_numbers = #tpu.dot_dimension_numbers<[1], [1], [0], [0], [0, 0, 1, 0], [], []>} : vector<16x16xbf16>, vector<16x16xbf16>, vector<16x16xf32> -> vector<16x16xf32>
    %cst_65 = arith.constant 2.500000e-01 : f32
    %180 = vector.broadcast %cst_65 : f32 to vector<16x16xf32>
    %181 = arith.mulf %179, %180 : vector<16x16xf32>
    %182 = arith.addf %181, %1 : vector<16x16xf32>
    %cst_66 = arith.constant dense<0xFF800000> : vector<16xf32>
    %183 = vector.multi_reduction <maximumf>, %182, %cst_66 [1] : vector<16x16xf32> to vector<16xf32>
    %184 = vector.shape_cast %183 : vector<16xf32> to vector<16x1xf32>
    %185 = vector.broadcast %184 : vector<16x1xf32> to vector<16x16xf32>
    %186 = arith.subf %182, %185 : vector<16x16xf32>
    %187 = math.exp %186 : vector<16x16xf32>
    %cst_67 = arith.constant dense<0.000000e+00> : vector<16xf32>
    %188 = vector.multi_reduction <add>, %187, %cst_67 [1] : vector<16x16xf32> to vector<16xf32>
    %189 = vector.shape_cast %188 : vector<16xf32> to vector<16x1xf32>
    %190 = tpu.reciprocal %189 {approx = true} : vector<16x1xf32> -> vector<16x1xf32>
    %191 = vector.broadcast %190 : vector<16x1xf32> to vector<16x16xf32>
    %192 = arith.mulf %187, %191 : vector<16x16xf32>
    %193 = arith.truncf %192 : vector<16x16xf32> to vector<16x16xbf16>
    %194 = arith.truncf %176 : vector<16x16xf32> to vector<16x16xbf16>
    %cst_68 = arith.constant dense<0.000000e+00> : vector<16x16xf32>
    %195 = tpu.matmul %193, %194, %cst_68 {dimension_numbers = #tpu.dot_dimension_numbers<[1], [0], [0], [1], [0, 0, 1, 1], [], []>} : vector<16x16xbf16>, vector<16x16xbf16>, vector<16x16xf32> -> vector<16x16xf32>
    %196 = vector.extract_strided_slice %173 {offsets = [0, 16], sizes = [16, 16], strides = [1, 1]} : vector<16x96xf32> to vector<16x16xf32>
    %197 = vector.extract_strided_slice %173 {offsets = [0, 48], sizes = [16, 16], strides = [1, 1]} : vector<16x96xf32> to vector<16x16xf32>
    %198 = vector.extract_strided_slice %173 {offsets = [0, 80], sizes = [16, 16], strides = [1, 1]} : vector<16x96xf32> to vector<16x16xf32>
    %199 = arith.truncf %196 : vector<16x16xf32> to vector<16x16xbf16>
    %200 = arith.truncf %197 : vector<16x16xf32> to vector<16x16xbf16>
    %cst_69 = arith.constant dense<0.000000e+00> : vector<16x16xf32>
    %201 = tpu.matmul %199, %200, %cst_69 {dimension_numbers = #tpu.dot_dimension_numbers<[1], [1], [0], [0], [0, 0, 1, 0], [], []>} : vector<16x16xbf16>, vector<16x16xbf16>, vector<16x16xf32> -> vector<16x16xf32>
    %cst_70 = arith.constant 2.500000e-01 : f32
    %202 = vector.broadcast %cst_70 : f32 to vector<16x16xf32>
    %203 = arith.mulf %201, %202 : vector<16x16xf32>
    %204 = arith.addf %203, %1 : vector<16x16xf32>
    %cst_71 = arith.constant dense<0xFF800000> : vector<16xf32>
    %205 = vector.multi_reduction <maximumf>, %204, %cst_71 [1] : vector<16x16xf32> to vector<16xf32>
    %206 = vector.shape_cast %205 : vector<16xf32> to vector<16x1xf32>
    %207 = vector.broadcast %206 : vector<16x1xf32> to vector<16x16xf32>
    %208 = arith.subf %204, %207 : vector<16x16xf32>
    %209 = math.exp %208 : vector<16x16xf32>
    %cst_72 = arith.constant dense<0.000000e+00> : vector<16xf32>
    %210 = vector.multi_reduction <add>, %209, %cst_72 [1] : vector<16x16xf32> to vector<16xf32>
    %211 = vector.shape_cast %210 : vector<16xf32> to vector<16x1xf32>
    %212 = tpu.reciprocal %211 {approx = true} : vector<16x1xf32> -> vector<16x1xf32>
    %213 = vector.broadcast %212 : vector<16x1xf32> to vector<16x16xf32>
    %214 = arith.mulf %209, %213 : vector<16x16xf32>
    %215 = arith.truncf %214 : vector<16x16xf32> to vector<16x16xbf16>
    %216 = arith.truncf %198 : vector<16x16xf32> to vector<16x16xbf16>
    %cst_73 = arith.constant dense<0.000000e+00> : vector<16x16xf32>
    %217 = tpu.matmul %215, %216, %cst_73 {dimension_numbers = #tpu.dot_dimension_numbers<[1], [0], [0], [1], [0, 0, 1, 1], [], []>} : vector<16x16xbf16>, vector<16x16xbf16>, vector<16x16xf32> -> vector<16x16xf32>
    %218 = tpu.concatenate %195, %217 in 1 : vector<16x16xf32>, vector<16x16xf32> -> vector<16x32xf32>
    %219 = arith.truncf %218 : vector<16x32xf32> to vector<16x32xbf16>
    %cst_74 = arith.constant dense<0.000000e+00> : vector<16x32xf32>
    %220 = tpu.matmul %219, %159, %cst_74 {dimension_numbers = #tpu.dot_dimension_numbers<[1], [0], [0], [1], [0, 0, 1, 1], [], []>} : vector<16x32xbf16>, vector<32x32xbf16>, vector<16x32xf32> -> vector<16x32xf32>
    %221 = vector.broadcast %163 : vector<1x32xf32> to vector<16x32xf32>
    %222 = arith.addf %220, %221 : vector<16x32xf32>
    %223 = arith.addf %157, %222 : vector<16x32xf32>
    %cst_75 = arith.constant dense<0.000000e+00> : vector<16xf32>
    %224 = vector.multi_reduction <add>, %223, %cst_75 [1] : vector<16x32xf32> to vector<16xf32>
    %225 = vector.shape_cast %224 : vector<16xf32> to vector<16x1xf32>
    %cst_76 = arith.constant 3.200000e+01 : f32
    %226 = vector.broadcast %cst_76 : f32 to vector<16x1xf32>
    %227 = arith.divf %225, %226 : vector<16x1xf32>
    %228 = vector.broadcast %227 : vector<16x1xf32> to vector<16x32xf32>
    %229 = arith.subf %223, %228 : vector<16x32xf32>
    %230 = arith.mulf %229, %229 : vector<16x32xf32>
    %cst_77 = arith.constant dense<0.000000e+00> : vector<16xf32>
    %231 = vector.multi_reduction <add>, %230, %cst_77 [1] : vector<16x32xf32> to vector<16xf32>
    %232 = vector.shape_cast %231 : vector<16xf32> to vector<16x1xf32>
    %cst_78 = arith.constant 3.200000e+01 : f32
    %233 = vector.broadcast %cst_78 : f32 to vector<16x1xf32>
    %234 = arith.divf %232, %233 : vector<16x1xf32>
    %235 = vector.broadcast %227 : vector<16x1xf32> to vector<16x32xf32>
    %236 = arith.subf %223, %235 : vector<16x32xf32>
    %cst_79 = arith.constant 9.99999996E-13 : f32
    %237 = vector.broadcast %cst_79 : f32 to vector<16x1xf32>
    %238 = arith.addf %234, %237 : vector<16x1xf32>
    %239 = math.rsqrt %238 : vector<16x1xf32>
    %240 = vector.broadcast %239 : vector<16x1xf32> to vector<16x32xf32>
    %241 = arith.mulf %236, %240 : vector<16x32xf32>
    %242 = vector.broadcast %164 : vector<1x32xf32> to vector<16x32xf32>
    %243 = arith.mulf %241, %242 : vector<16x32xf32>
    %244 = vector.broadcast %165 : vector<1x32xf32> to vector<16x32xf32>
    %245 = arith.addf %243, %244 : vector<16x32xf32>
    %246 = arith.truncf %245 : vector<16x32xf32> to vector<16x32xbf16>
    %cst_80 = arith.constant dense<0.000000e+00> : vector<16x64xf32>
    %247 = tpu.matmul %246, %160, %cst_80 {dimension_numbers = #tpu.dot_dimension_numbers<[1], [0], [0], [1], [0, 0, 1, 1], [], []>} : vector<16x32xbf16>, vector<32x64xbf16>, vector<16x64xf32> -> vector<16x64xf32>
    %248 = vector.broadcast %166 : vector<1x64xf32> to vector<16x64xf32>
    %249 = arith.addf %247, %248 : vector<16x64xf32>
    %cst_81 = arith.constant 5.000000e-01 : f32
    %250 = vector.broadcast %cst_81 : f32 to vector<16x64xf32>
    %251 = arith.mulf %250, %249 : vector<16x64xf32>
    %cst_82 = arith.constant 4.471500e-02 : f32
    %252 = vector.broadcast %cst_82 : f32 to vector<16x64xf32>
    %253 = arith.mulf %252, %249 : vector<16x64xf32>
    %254 = arith.mulf %253, %249 : vector<16x64xf32>
    %255 = arith.mulf %254, %249 : vector<16x64xf32>
    %256 = arith.addf %249, %255 : vector<16x64xf32>
    %cst_83 = arith.constant 0.797884583 : f32
    %257 = vector.broadcast %cst_83 : f32 to vector<16x64xf32>
    %258 = arith.mulf %257, %256 : vector<16x64xf32>
    %259 = math.tanh %258 : vector<16x64xf32>
    %cst_84 = arith.constant 1.000000e+00 : f32
    %260 = vector.broadcast %cst_84 : f32 to vector<16x64xf32>
    %261 = arith.addf %260, %259 : vector<16x64xf32>
    %262 = arith.mulf %251, %261 : vector<16x64xf32>
    %263 = arith.truncf %262 : vector<16x64xf32> to vector<16x64xbf16>
    %cst_85 = arith.constant dense<0.000000e+00> : vector<16x32xf32>
    %264 = tpu.matmul %263, %161, %cst_85 {dimension_numbers = #tpu.dot_dimension_numbers<[1], [0], [0], [1], [0, 0, 1, 1], [], []>} : vector<16x64xbf16>, vector<64x32xbf16>, vector<16x32xf32> -> vector<16x32xf32>
    %265 = vector.broadcast %167 : vector<1x32xf32> to vector<16x32xf32>
    %266 = arith.addf %264, %265 : vector<16x32xf32>
    %267 = arith.addf %245, %266 : vector<16x32xf32>
    %cst_86 = arith.constant dense<0.000000e+00> : vector<16xf32>
    %268 = vector.multi_reduction <add>, %267, %cst_86 [1] : vector<16x32xf32> to vector<16xf32>
    %269 = vector.shape_cast %268 : vector<16xf32> to vector<16x1xf32>
    %cst_87 = arith.constant 3.200000e+01 : f32
    %270 = vector.broadcast %cst_87 : f32 to vector<16x1xf32>
    %271 = arith.divf %269, %270 : vector<16x1xf32>
    %272 = vector.broadcast %271 : vector<16x1xf32> to vector<16x32xf32>
    %273 = arith.subf %267, %272 : vector<16x32xf32>
    %274 = arith.mulf %273, %273 : vector<16x32xf32>
    %cst_88 = arith.constant dense<0.000000e+00> : vector<16xf32>
    %275 = vector.multi_reduction <add>, %274, %cst_88 [1] : vector<16x32xf32> to vector<16xf32>
    %276 = vector.shape_cast %275 : vector<16xf32> to vector<16x1xf32>
    %cst_89 = arith.constant 3.200000e+01 : f32
    %277 = vector.broadcast %cst_89 : f32 to vector<16x1xf32>
    %278 = arith.divf %276, %277 : vector<16x1xf32>
    %279 = vector.broadcast %271 : vector<16x1xf32> to vector<16x32xf32>
    %280 = arith.subf %267, %279 : vector<16x32xf32>
    %cst_90 = arith.constant 9.99999996E-13 : f32
    %281 = vector.broadcast %cst_90 : f32 to vector<16x1xf32>
    %282 = arith.addf %278, %281 : vector<16x1xf32>
    %283 = math.rsqrt %282 : vector<16x1xf32>
    %284 = vector.broadcast %283 : vector<16x1xf32> to vector<16x32xf32>
    %285 = arith.mulf %280, %284 : vector<16x32xf32>
    %286 = vector.broadcast %168 : vector<1x32xf32> to vector<16x32xf32>
    %287 = arith.mulf %285, %286 : vector<16x32xf32>
    %288 = vector.broadcast %169 : vector<1x32xf32> to vector<16x32xf32>
    %289 = arith.addf %287, %288 : vector<16x32xf32>
    %c320 = arith.constant 320 : index
    %c0_91 = arith.constant 0 : index
    %290 = vector.load %arg2[%c320, %c0_91] : memref<352x96xbf16, #tpu.memory_space<vmem>>, vector<32x12xbf16>
    %c18 = arith.constant 18 : index
    %c0_92 = arith.constant 0 : index
    %291 = vector.load %arg3[%c18, %c0_92] : memref<19x96xf32, #tpu.memory_space<vmem>>, vector<1x12xf32>
    %292 = arith.truncf %289 : vector<16x32xf32> to vector<16x32xbf16>
    %cst_93 = arith.constant dense<0.000000e+00> : vector<16x12xf32>
    %293 = tpu.matmul %292, %290, %cst_93 {dimension_numbers = #tpu.dot_dimension_numbers<[1], [0], [0], [1], [0, 0, 1, 1], [], []>} : vector<16x32xbf16>, vector<32x12xbf16>, vector<16x12xf32> -> vector<16x12xf32>
    %294 = vector.broadcast %291 : vector<1x12xf32> to vector<16x12xf32>
    %295 = arith.addf %293, %294 : vector<16x12xf32>
    %c0_94 = arith.constant 0 : index
    %c0_95 = arith.constant 0 : index
    %296 = vector.load %arg4[%c0_94, %c0_95] : memref<16x12xf32, #tpu.memory_space<vmem>>, vector<16x12xf32>
    tpu.vector_store %arg4[%c0_94, %c0_95], %295 {strides = array<i32>} : memref<16x12xf32, #tpu.memory_space<vmem>>, vector<16x12xf32>,
    return
  }
  func.func @transform_0(%arg0: i32) -> (i32, i32) {
    %c0_i32 = arith.constant 0 : i32
    %c0_i32_0 = arith.constant 0 : i32
    %c0_i32_1 = arith.constant 0 : i32
    return %c0_i32, %c0_i32_0 : i32, i32
  }
  func.func @transform_1(%arg0: i32) -> (i32, i32) {
    %c0_i32 = arith.constant 0 : i32
    %c0_i32_0 = arith.constant 0 : i32
    %c0_i32_1 = arith.constant 0 : i32
    return %c0_i32, %c0_i32_0 : i32, i32
  }
  func.func @transform_2(%arg0: i32) -> (i32, i32) {
    %c0_i32 = arith.constant 0 : i32
    %c0_i32_0 = arith.constant 0 : i32
    %c0_i32_1 = arith.constant 0 : i32
    return %c0_i32, %c0_i32_0 : i32, i32
  }
  func.func @transform_3(%arg0: i32) -> (i32, i32) {
    %c0_i32 = arith.constant 0 : i32
    %c0_i32_0 = arith.constant 0 : i32
    %c0_i32_1 = arith.constant 0 : i32
    return %c0_i32, %c0_i32_0 : i32, i32
  }
}

</mosaic_0001>

<llo_original>
// kernel: tpu_custom_call.1
$region0: #{tpu_custom_call.1}
  #allocation0 [shape = 'u32[]', space=smem, size = 0x4, offset = 0x4, fixed_abs, tag = 'smem constant byte address 0x4 - core index']
  #allocation1 [shape = 'u32[72,128]{1,0:T(1,128)}', space=vmem, size = 0x9000, scoped, tag = 'internal scratch']
  %s0 = inlined_call_operand.vmem [shape: f32[16,48], index: 0, kind: input, shape index: {}]
  %s1 = inlined_call_operand.vmem [shape: bf16[352,96], index: 1, kind: input, shape index: {}]
  %s2 = inlined_call_operand.vmem [shape: f32[19,96], index: 2, kind: input, shape index: {}]
  %s3 = inlined_call_operand.hbm [shape: f32[16,12], index: 3, kind: output, shape index: {}]
  %s4 = sld [smem:[#allocation0]]
  $region22: #{tpu_custom_call.1} parent=0
    _
  %s6 = ssub.s32 1, %s4
  %s7 = scalar_select 0, %s6, %s4
  $region1: #{tpu_custom_call.1} parent=0
    #allocation2 [shape = 'u8[8192]{0}', space=vmem, size = 0x2000, scoped, tag = 'output window, operand 0, single buffered']
    #allocation3 [shape = 's32[1]{0}', space=sflag, size = 0x4, scoped, tag = 'scoped memory for tpu_custom_call.1']
    %8 = vsyncpa [#allocation3], 0
    // Predicated region
    $region2: #{tpu_custom_call.1} parent=1 // pred_check
      _
    $region3: #{tpu_custom_call.1} parent=1 // pred_check_branch
      %10 = sbr.rel (0) target = $region5
    $region4: #{tpu_custom_call.1} parent=1 // pred_region
      _
    $region5: #{tpu_custom_call.1} parent=1 // pred_fallthru
      _
    // Predicated region
    $region6: #{tpu_custom_call.1} parent=1 // pred_check
      _
    $region7: #{tpu_custom_call.1} parent=1 // pred_check_branch
      %12 = sbr.rel (0) target = $region9
    $region8: #{tpu_custom_call.1} parent=1 // pred_region
      _
    $region9: #{tpu_custom_call.1} parent=1 // pred_fallthru
      _
    // Predicated region
    $region10: #{tpu_custom_call.1} parent=1 // pred_check
      _
    $region11: #{tpu_custom_call.1} parent=1 // pred_check_branch
      %14 = sbr.rel (0) target = $region13
    $region12: #{tpu_custom_call.1} parent=1 // pred_region
      _
    $region13: #{tpu_custom_call.1} parent=1 // pred_fallthru
      _
    %v16 = vld [vmem:[%s0] sm:$0xff]
    %v17 = vld [vmem:[%s0 + $0x8] sm:$0xff]
    %v18 = vld [vmem:[%s2] sm:$0x1]
    %v19 = vld [vmem:[%s2 + $0x1] sm:$0x1]
    %vm20 = vcmask 261120
    %v21 = vsel %vm20, %v16, 0.0
    %22 = vadd.xlane.f32.xlu0 %v21
    %v23 = vpop.xlane.xlu0 %22
    %v24 = vsel %vm20, %v17, 0.0
    %25 = vadd.xlane.f32.xlu0 %v24
    %v26 = vpop.xlane.xlu0 %25
    %v27 = vrcp.pop 32.0
    %v28 = vmul.f32 32.0, %v27
    %v29 = vsub.f32 1.0, %v28
    %v30 = vmul.f32 %v27, %v29
    %v31 = vadd.f32 %v27, %v30
    %vm32 = vweird.f32 %v27
    %v33 = vsel %vm32, %v27, %v31
    %v34 = vmul.f32 %v23, %v33
    %v35 = vmul.f32 %v26, %v33
    %v36 = vsub.f32 %v16, %v34
    %v37 = vsub.f32 %v17, %v35
    %v38 = vmul.f32 %v36, %v36
    %v39 = vmul.f32 %v37, %v37
    %v40 = vsel %vm20, %v38, 0.0
    %41 = vadd.xlane.f32.xlu0 %v40
    %v42 = vpop.xlane.xlu0 %41
    %v43 = vsel %vm20, %v39, 0.0
    %44 = vadd.xlane.f32.xlu0 %v43
    %v45 = vpop.xlane.xlu0 %44
    %v46 = vmul.f32 %v42, %v33
    %v47 = vmul.f32 %v45, %v33
    %v48 = vadd.f32 %v46, 1e-12
    %v49 = vadd.f32 %v47, 1e-12
    %v50 = vrsqrt.pop %v48
    %v51 = vmul.f32 %v50, %v48
    %v52 = vmul.f32 %v51, %v50
    %v53 = vmul.f32 0.5, %v52
    %v54 = vsub.f32 1.5, %v53
    %v55 = vmul.f32 %v50, %v54
    %vm56 = vweird.f32 %v48
    %vm57 = vweird.f32 %v50
    %vm58 = vmor %vm56, %vm57
    %v59 = vsel %vm58, %v50, %v55
    %v60 = vrsqrt.pop %v49
    %v61 = vmul.f32 %v60, %v49
    %v62 = vmul.f32 %v61, %v60
    %v63 = vmul.f32 0.5, %v62
    %v64 = vsub.f32 1.5, %v63
    %v65 = vmul.f32 %v60, %v64
    %vm66 = vweird.f32 %v49
    %vm67 = vweird.f32 %v60
    %vm68 = vmor %vm66, %vm67
    %v69 = vsel %vm68, %v60, %v65
    %v70 = vmul.f32 %v36, %v59
    %v71 = vmul.f32 %v37, %v69
    %v72 = vperm.slane %v18, 0
    %v73 = vmul.f32 %v70, %v72
    %v74 = vmul.f32 %v71, %v72
    %v75 = vperm.slane %v19, 0
    %v76 = vadd.f32 %v73, %v75
    %v77 = vadd.f32 %v74, %v75
    %v78 = vld [vmem:[%s1] sm:$0xf]
    %v79 = vld [vmem:[%s1 + $0x4] sm:$0xf]
    %v80 = vld [vmem:[%s1 + $0x8] sm:$0xf]
    %v81 = vld [vmem:[%s1 + $0xc] sm:$0xf]
    %v82 = vld [vmem:[%s1 + $0x10] sm:$0xf]
    %v83 = vld [vmem:[%s1 + $0x14] sm:$0xf]
    %v84 = vld [vmem:[%s1 + $0x18] sm:$0xf]
    %v85 = vld [vmem:[%s1 + $0x1c] sm:$0xf]
    %v86 = vld [vmem:[%s1 + $0x20] sm:$0xf]
    %v87 = vld [vmem:[%s1 + $0x24] sm:$0xf]
    %v88 = vld [vmem:[%s1 + $0x28] sm:$0xf]
    %v89 = vld [vmem:[%s1 + $0x2c] sm:$0xf]
    %v90 = vld [vmem:[%s1 + $0x30] sm:$0xf]
    %v91 = vld [vmem:[%s1 + $0x34] sm:$0xf]
    %v92 = vld [vmem:[%s1 + $0x38] sm:$0xf]
    %v93 = vld [vmem:[%s1 + $0x3c] sm:$0xf]
    %v94 = vld [vmem:[%s1 + $0x40] sm:$0xf]
    %v95 = vld [vmem:[%s1 + $0x44] sm:$0xf]
    %v96 = vld [vmem:[%s1 + $0x48] sm:$0xf]
    %v97 = vld [vmem:[%s1 + $0x4c] sm:$0xf]
    %v98 = vld [vmem:[%s2 + $0x2] sm:$0x1]
    %v99 = vld [vmem:[%s2 + $0x3] sm:$0x1]
    %v100 = vld [vmem:[%s2 + $0x4] sm:$0x1]
    %v101 = vld [vmem:[%s2 + $0x5] sm:$0x1]
    %v102 = vld [vmem:[%s2 + $0x6] sm:$0x1]
    %v103 = vld [vmem:[%s2 + $0x7] sm:$0x1]
    %v104 = vld [vmem:[%s2 + $0x8] sm:$0x1]
    %v105 = vld [vmem:[%s2 + $0x9] sm:$0x1]
    %v106 = vpack.c.bf16 %v77, %v76
    %v107 = vperm.slane %v98, 0
    %v112 = vunpack.c.l.b16 %v78
    %v113 = vunpack.c.l.b16 %v79
    %v114 = vunpack.c.l.b16 %v80
    %v115 = vunpack.c.l.b16 %v81
    %v116 = vpack.c.b16 %v113, %v112
    %v117 = vpack.c.b16 %v115, %v114
    %v121 = vsel %vm20, %v106, 0
    %123 = vmatpush.bf16.msra.mxu0 0
    %124 = vmatpush.bf16.msra.mxu0 0
    %125 = vmatpush.bf16.msra.mxu0 0
    %126 = vmatpush.bf16.msra.mxu0 0
    %127 = vmatpush.bf16.msra.mxu0 0
    %128 = vmatpush.bf16.msra.mxu0 0
    %129 = vmatpush.bf16.msra.mxu0 %v117
    %130 = vmatpush.bf16.msra.mxu0 %v116
    %131 = vmatmul.bf16.gmra.mxu0 %v121
    %v132 = vpop.f32.mrf.mxu0
    %v133 = vadd.f32 %v107, %v132
    %v134 = vpop.f32.mrf.mxu0
    %v135 = vadd.f32 %v107, %v134
    %136 = vdwg.mxu0
    %v137 = vpack.c.bf16 %v135, %v133
    %139 = vrot.lane.b32.xlu0 %v137, 96
    %v140 = vpop.permute.xlu0 %139
    %vm141 = vcmask 130048
    %v143 = vsel %vm141, %v137, 0
    %v146 = vsel %vm141, %v140, 0
    %148 = vmatpush.bf16.xpose.msra.mxu0 0
    %149 = vmatpush.bf16.xpose.msra.mxu0 0
    %150 = vmatpush.bf16.xpose.msra.mxu0 0
    %151 = vmatpush.bf16.xpose.msra.mxu0 0
    %152 = vmatpush.bf16.xpose.msra.mxu0 0
    %153 = vmatpush.bf16.xpose.msra.mxu0 0
    %154 = vmatpush.bf16.xpose.msra.mxu0 0
    %155 = vmatpush.bf16.xpose.msra.mxu0 %v146
    %156 = vmatmul.bf16.gmra.mxu0 %v143
    %v157 = vpop.f32.mrf.mxu0
    %v158 = vadd.f32 0.0, %v157
    %v159 = vpop.f32.mrf.mxu0
    %v160 = vadd.f32 0.0, %v159
    %161 = vdwg.mxu0
    %v162 = vmul.f32 %v158, 0.25
    %v163 = vmul.f32 %v160, 0.25
    %166 = vrot.lane.b32.xlu0 %v16, 96
    %v167 = vpop.permute.xlu0 %166
    %168 = vrot.lane.b32.xlu0 %v17, 96
    %v169 = vpop.permute.xlu0 %168
    %v172 = vadd.f32 %v162, %v167
    %v173 = vadd.f32 %v163, %v169
    %v174 = vsel %vm141, %v172, -inf
    %175 = vmax.xlane.f32.xlu0 %v174
    %v176 = vpop.xlane.xlu0 %175
    %v177 = vsel %vm141, %v173, -inf
    %178 = vmax.xlane.f32.xlu0 %v177
    %v179 = vpop.xlane.xlu0 %178
    %v180 = vsub.f32 %v172, %v176
    %v181 = vsub.f32 %v173, %v179
    %v182 = vmul.f32 %v180, 1.442695
    %v183 = vpow.pop %v182
    %v184 = vmul.f32 %v181, 1.442695
    %v185 = vpow.pop %v184
    %v186 = vsel %vm141, %v183, 0.0
    %187 = vadd.xlane.f32.xlu0 %v186
    %v188 = vpop.xlane.xlu0 %187
    %v189 = vsel %vm141, %v185, 0.0
    %190 = vadd.xlane.f32.xlu0 %v189
    %v191 = vpop.xlane.xlu0 %190
    %v192 = vrcp.pop %v188
    %v193 = vrcp.pop %v191
    %v194 = vmul.f32 %v183, %v192
    %v195 = vmul.f32 %v185, %v193
    %v196 = vpack.c.bf16 %v195, %v194
    %197 = vrot.lane.b32.xlu0 %v137, 64
    %v198 = vpop.permute.xlu0 %197
    %v201 = vsel %vm141, %v196, 0
    %203 = vmatpush.bf16.msra.mxu0 0
    %204 = vmatpush.bf16.msra.mxu0 0
    %205 = vmatpush.bf16.msra.mxu0 0
    %206 = vmatpush.bf16.msra.mxu0 0
    %207 = vmatpush.bf16.msra.mxu0 0
    %208 = vmatpush.bf16.msra.mxu0 0
    %209 = vmatpush.bf16.msra.mxu0 0
    %210 = vmatpush.bf16.msra.mxu0 %v198
    %211 = vmatmul.bf16.gmra.mxu0 %v201
    %v212 = vpop.f32.mrf.mxu0
    %v213 = vadd.f32 0.0, %v212
    %v214 = vpop.f32.mrf.mxu0
    %v215 = vadd.f32 0.0, %v214
    %216 = vdwg.mxu0
    %217 = vrot.lane.b32.xlu0 %v137, 112
    %v218 = vpop.permute.xlu0 %217
    %219 = vrot.lane.b32.xlu0 %v137, 80
    %v220 = vpop.permute.xlu0 %219
    %v222 = vsel %vm141, %v218, 0
    %v225 = vsel %vm141, %v220, 0
    %227 = vmatpush.bf16.xpose.msra.mxu0 0
    %228 = vmatpush.bf16.xpose.msra.mxu0 0
    %229 = vmatpush.bf16.xpose.msra.mxu0 0
    %230 = vmatpush.bf16.xpose.msra.mxu0 0
    %231 = vmatpush.bf16.xpose.msra.mxu0 0
    %232 = vmatpush.bf16.xpose.msra.mxu0 0
    %233 = vmatpush.bf16.xpose.msra.mxu0 0
    %234 = vmatpush.bf16.xpose.msra.mxu0 %v225
    %235 = vmatmul.bf16.gmra.mxu0 %v222
    %v236 = vpop.f32.mrf.mxu0
    %v237 = vadd.f32 0.0, %v236
    %v238 = vpop.f32.mrf.mxu0
    %v239 = vadd.f32 0.0, %v238
    %240 = vdwg.mxu0
    %v241 = vmul.f32 %v237, 0.25
    %v242 = vmul.f32 %v239, 0.25
    %v243 = vadd.f32 %v241, %v167
    %v244 = vadd.f32 %v242, %v169
    %v245 = vsel %vm141, %v243, -inf
    %246 = vmax.xlane.f32.xlu0 %v245
    %v247 = vpop.xlane.xlu0 %246
    %v248 = vsel %vm141, %v244, -inf
    %249 = vmax.xlane.f32.xlu0 %v248
    %v250 = vpop.xlane.xlu0 %249
    %v251 = vsub.f32 %v243, %v247
    %v252 = vsub.f32 %v244, %v250
    %v253 = vmul.f32 %v251, 1.442695
    %v254 = vpow.pop %v253
    %v255 = vmul.f32 %v252, 1.442695
    %v256 = vpow.pop %v255
    %v257 = vsel %vm141, %v254, 0.0
    %258 = vadd.xlane.f32.xlu0 %v257
    %v259 = vpop.xlane.xlu0 %258
    %v260 = vsel %vm141, %v256, 0.0
    %261 = vadd.xlane.f32.xlu0 %v260
    %v262 = vpop.xlane.xlu0 %261
    %v263 = vrcp.pop %v259
    %v264 = vrcp.pop %v262
    %v265 = vmul.f32 %v254, %v263
    %v266 = vmul.f32 %v256, %v264
    %v267 = vpack.c.bf16 %v266, %v265
    %268 = vrot.lane.b32.xlu0 %v137, 48
    %v269 = vpop.permute.xlu0 %268
    %v272 = vsel %vm141, %v267, 0
    %274 = vmatpush.bf16.msra.mxu0 0
    %275 = vmatpush.bf16.msra.mxu0 0
    %276 = vmatpush.bf16.msra.mxu0 0
    %277 = vmatpush.bf16.msra.mxu0 0
    %278 = vmatpush.bf16.msra.mxu0 0
    %279 = vmatpush.bf16.msra.mxu0 0
    %280 = vmatpush.bf16.msra.mxu0 0
    %281 = vmatpush.bf16.msra.mxu0 %v269
    %282 = vmatmul.bf16.gmra.mxu0 %v272
    %v283 = vpop.f32.mrf.mxu0
    %v284 = vadd.f32 0.0, %v283
    %v285 = vpop.f32.mrf.mxu0
    %v286 = vadd.f32 0.0, %v285
    %287 = vdwg.mxu0
    %290 = vrot.lane.b32.xlu0 %v284, 16
    %v291 = vpop.permute.xlu0 %290
    %292 = vrot.lane.b32.xlu0 %v286, 16
    %v293 = vpop.permute.xlu0 %292
    %v296 = vsel %vm141, %v213, %v291
    %v297 = vsel %vm141, %v215, %v293
    %v298 = vpack.c.bf16 %v297, %v296
    %v299 = vperm.slane %v99, 0
    %v304 = vunpack.c.l.b16 %v82
    %v305 = vunpack.c.l.b16 %v83
    %v306 = vunpack.c.l.b16 %v84
    %v307 = vunpack.c.l.b16 %v85
    %v308 = vpack.c.b16 %v305, %v304
    %v309 = vpack.c.b16 %v307, %v306
    %v313 = vsel %vm20, %v298, 0
    %315 = vmatpush.bf16.msra.mxu0 0
    %316 = vmatpush.bf16.msra.mxu0 0
    %317 = vmatpush.bf16.msra.mxu0 0
    %318 = vmatpush.bf16.msra.mxu0 0
    %319 = vmatpush.bf16.msra.mxu0 0
    %320 = vmatpush.bf16.msra.mxu0 0
    %321 = vmatpush.bf16.msra.mxu0 %v309
    %322 = vmatpush.bf16.msra.mxu0 %v308
    %323 = vmatmul.bf16.gmra.mxu0 %v313
    %v324 = vpop.f32.mrf.mxu0
    %v325 = vadd.f32 %v299, %v324
    %v326 = vpop.f32.mrf.mxu0
    %v327 = vadd.f32 %v299, %v326
    %328 = vdwg.mxu0
    %v329 = vadd.f32 %v76, %v325
    %v330 = vadd.f32 %v77, %v327
    %v331 = vsel %vm20, %v329, 0.0
    %332 = vadd.xlane.f32.xlu0 %v331
    %v333 = vpop.xlane.xlu0 %332
    %v334 = vsel %vm20, %v330, 0.0
    %335 = vadd.xlane.f32.xlu0 %v334
    %v336 = vpop.xlane.xlu0 %335
    %v337 = vmul.f32 %v333, %v33
    %v338 = vmul.f32 %v336, %v33
    %v339 = vsub.f32 %v329, %v337
    %v340 = vsub.f32 %v330, %v338
    %v341 = vmul.f32 %v339, %v339
    %v342 = vmul.f32 %v340, %v340
    %v343 = vsel %vm20, %v341, 0.0
    %344 = vadd.xlane.f32.xlu0 %v343
    %v345 = vpop.xlane.xlu0 %344
    %v346 = vsel %vm20, %v342, 0.0
    %347 = vadd.xlane.f32.xlu0 %v346
    %v348 = vpop.xlane.xlu0 %347
    %v349 = vmul.f32 %v345, %v33
    %v350 = vmul.f32 %v348, %v33
    %v351 = vadd.f32 %v349, 1e-12
    %v352 = vadd.f32 %v350, 1e-12
    %v353 = vrsqrt.pop %v351
    %v354 = vmul.f32 %v353, %v351
    %v355 = vmul.f32 %v354, %v353
    %v356 = vmul.f32 0.5, %v355
    %v357 = vsub.f32 1.5, %v356
    %v358 = vmul.f32 %v353, %v357
    %vm359 = vweird.f32 %v351
    %vm360 = vweird.f32 %v353
    %vm361 = vmor %vm359, %vm360
    %v362 = vsel %vm361, %v353, %v358
    %v363 = vrsqrt.pop %v352
    %v364 = vmul.f32 %v363, %v352
    %v365 = vmul.f32 %v364, %v363
    %v366 = vmul.f32 0.5, %v365
    %v367 = vsub.f32 1.5, %v366
    %v368 = vmul.f32 %v363, %v367
    %vm369 = vweird.f32 %v352
    %vm370 = vweird.f32 %v363
    %vm371 = vmor %vm369, %vm370
    %v372 = vsel %vm371, %v363, %v368
    %v373 = vmul.f32 %v339, %v362
    %v374 = vmul.f32 %v340, %v372
    %v375 = vperm.slane %v100, 0
    %v376 = vmul.f32 %v373, %v375
    %v377 = vmul.f32 %v374, %v375
    %v378 = vperm.slane %v101, 0
    %v379 = vadd.f32 %v376, %v378
    %v380 = vadd.f32 %v377, %v378
    %v381 = vpack.c.bf16 %v380, %v379
    %v382 = vperm.slane %v102, 0
    %v387 = vunpack.c.l.b16 %v86
    %v388 = vunpack.c.l.b16 %v87
    %v389 = vunpack.c.l.b16 %v88
    %v390 = vunpack.c.l.b16 %v89
    %v391 = vpack.c.b16 %v388, %v387
    %v392 = vpack.c.b16 %v390, %v389
    %v396 = vsel %vm20, %v381, 0
    %398 = vmatpush.bf16.msra.mxu0 0
    %399 = vmatpush.bf16.msra.mxu0 0
    %400 = vmatpush.bf16.msra.mxu0 0
    %401 = vmatpush.bf16.msra.mxu0 0
    %402 = vmatpush.bf16.msra.mxu0 0
    %403 = vmatpush.bf16.msra.mxu0 0
    %404 = vmatpush.bf16.msra.mxu0 %v392
    %405 = vmatpush.bf16.msra.mxu0 %v391
    %406 = vmatmul.bf16.gmra.mxu0 %v396
    %v407 = vpop.f32.mrf.mxu0
    %v408 = vadd.f32 %v382, %v407
    %v409 = vpop.f32.mrf.mxu0
    %v410 = vadd.f32 %v382, %v409
    %411 = vdwg.mxu0
    %v412 = vmul.f32 %v408, 0.5
    %v413 = vmul.f32 %v410, 0.5
    %v414 = vmul.f32 %v408, 0.044715
    %v415 = vmul.f32 %v410, 0.044715
    %v416 = vmul.f32 %v414, %v408
    %v417 = vmul.f32 %v415, %v410
    %v418 = vmul.f32 %v416, %v408
    %v419 = vmul.f32 %v417, %v410
    %v420 = vadd.f32 %v408, %v418
    %v421 = vadd.f32 %v410, %v419
    %v422 = vmul.f32 %v420, 0.7978846
    %v423 = vmul.f32 %v421, 0.7978846
    %v424 = vtanh.pop %v422
    %v425 = vtanh.pop %v423
    %v426 = vadd.f32 %v424, 1.0
    %v427 = vadd.f32 %v425, 1.0
    %v428 = vmul.f32 %v412, %v426
    %v429 = vmul.f32 %v413, %v427
    %v430 = vpack.c.bf16 %v429, %v428
    %v431 = vperm.slane %v103, 0
    %v440 = vunpack.c.l.b16 %v90
    %v441 = vunpack.c.l.b16 %v91
    %v442 = vunpack.c.l.b16 %v92
    %v443 = vunpack.c.l.b16 %v93
    %v444 = vunpack.c.l.b16 %v94
    %v445 = vunpack.c.l.b16 %v95
    %v446 = vunpack.c.l.b16 %v96
    %v447 = vunpack.c.l.b16 %v97
    %v448 = vpack.c.b16 %v441, %v440
    %v449 = vpack.c.b16 %v443, %v442
    %v450 = vpack.c.b16 %v445, %v444
    %v451 = vpack.c.b16 %v447, %v446
    %vm456 = vcmask 523264
    %v458 = vsel %vm456, %v430, 0
    %460 = vmatpush.bf16.msra.mxu0 0
    %461 = vmatpush.bf16.msra.mxu0 0
    %462 = vmatpush.bf16.msra.mxu0 0
    %463 = vmatpush.bf16.msra.mxu0 0
    %464 = vmatpush.bf16.msra.mxu0 %v451
    %465 = vmatpush.bf16.msra.mxu0 %v450
    %466 = vmatpush.bf16.msra.mxu0 %v449
    %467 = vmatpush.bf16.msra.mxu0 %v448
    %468 = vmatmul.bf16.gmra.mxu0 %v458
    %v469 = vpop.f32.mrf.mxu0
    %v470 = vadd.f32 %v431, %v469
    %v471 = vpop.f32.mrf.mxu0
    %v472 = vadd.f32 %v431, %v471
    %473 = vdwg.mxu0
    %v474 = vadd.f32 %v379, %v470
    %v475 = vadd.f32 %v380, %v472
    %v476 = vsel %vm20, %v474, 0.0
    %477 = vadd.xlane.f32.xlu0 %v476
    %v478 = vpop.xlane.xlu0 %477
    %v479 = vsel %vm20, %v475, 0.0
    %480 = vadd.xlane.f32.xlu0 %v479
    %v481 = vpop.xlane.xlu0 %480
    %v482 = vmul.f32 %v478, %v33
    %v483 = vmul.f32 %v481, %v33
    %v484 = vsub.f32 %v474, %v482
    %v485 = vsub.f32 %v475, %v483
    %v486 = vmul.f32 %v484, %v484
    %v487 = vmul.f32 %v485, %v485
    %v488 = vsel %vm20, %v486, 0.0
    %489 = vadd.xlane.f32.xlu0 %v488
    %v490 = vpop.xlane.xlu0 %489
    %v491 = vsel %vm20, %v487, 0.0
    %492 = vadd.xlane.f32.xlu0 %v491
    %v493 = vpop.xlane.xlu0 %492
    %v494 = vmul.f32 %v490, %v33
    %v495 = vmul.f32 %v493, %v33
    %v496 = vadd.f32 %v494, 1e-12
    %v497 = vadd.f32 %v495, 1e-12
    %v498 = vrsqrt.pop %v496
    %v499 = vmul.f32 %v498, %v496
    %v500 = vmul.f32 %v499, %v498
    %v501 = vmul.f32 0.5, %v500
    %v502 = vsub.f32 1.5, %v501
    %v503 = vmul.f32 %v498, %v502
    %vm504 = vweird.f32 %v496
    %vm505 = vweird.f32 %v498
    %vm506 = vmor %vm504, %vm505
    %v507 = vsel %vm506, %v498, %v503
    %v508 = vrsqrt.pop %v497
    %v509 = vmul.f32 %v508, %v497
    %v510 = vmul.f32 %v509, %v508
    %v511 = vmul.f32 0.5, %v510
    %v512 = vsub.f32 1.5, %v511
    %v513 = vmul.f32 %v508, %v512
    %vm514 = vweird.f32 %v497
    %vm515 = vweird.f32 %v508
    %vm516 = vmor %vm514, %vm515
    %v517 = vsel %vm516, %v508, %v513
    %v518 = vmul.f32 %v484, %v507
    %v519 = vmul.f32 %v485, %v517
    %v520 = vperm.slane %v104, 0
    %v521 = vmul.f32 %v518, %v520
    %v522 = vmul.f32 %v519, %v520
    %v523 = vperm.slane %v105, 0
    %v524 = vadd.f32 %v521, %v523
    %v525 = vadd.f32 %v522, %v523
    %v526 = vld [vmem:[%s1 + $0x50] sm:$0xf]
    %v527 = vld [vmem:[%s1 + $0x54] sm:$0xf]
    %v528 = vld [vmem:[%s1 + $0x58] sm:$0xf]
    %v529 = vld [vmem:[%s1 + $0x5c] sm:$0xf]
    %v530 = vld [vmem:[%s1 + $0x60] sm:$0xf]
    %v531 = vld [vmem:[%s1 + $0x64] sm:$0xf]
    %v532 = vld [vmem:[%s1 + $0x68] sm:$0xf]
    %v533 = vld [vmem:[%s1 + $0x6c] sm:$0xf]
    %v534 = vld [vmem:[%s1 + $0x70] sm:$0xf]
    %v535 = vld [vmem:[%s1 + $0x74] sm:$0xf]
    %v536 = vld [vmem:[%s1 + $0x78] sm:$0xf]
    %v537 = vld [vmem:[%s1 + $0x7c] sm:$0xf]
    %v538 = vld [vmem:[%s1 + $0x80] sm:$0xf]
    %v539 = vld [vmem:[%s1 + $0x84] sm:$0xf]
    %v540 = vld [vmem:[%s1 + $0x88] sm:$0xf]
    %v541 = vld [vmem:[%s1 + $0x8c] sm:$0xf]
    %v542 = vld [vmem:[%s1 + $0x90] sm:$0xf]
    %v543 = vld [vmem:[%s1 + $0x94] sm:$0xf]
    %v544 = vld [vmem:[%s1 + $0x98] sm:$0xf]
    %v545 = vld [vmem:[%s1 + $0x9c] sm:$0xf]
    %v546 = vld [vmem:[%s2 + $0xa] sm:$0x1]
    %v547 = vld [vmem:[%s2 + $0xb] sm:$0x1]
    %v548 = vld [vmem:[%s2 + $0xc] sm:$0x1]
    %v549 = vld [vmem:[%s2 + $0xd] sm:$0x1]
    %v550 = vld [vmem:[%s2 + $0xe] sm:$0x1]
    %v551 = vld [vmem:[%s2 + $0xf] sm:$0x1]
    %v552 = vld [vmem:[%s2 + $0x10] sm:$0x1]
    %v553 = vld [vmem:[%s2 + $0x11] sm:$0x1]
    %v554 = vpack.c.bf16 %v525, %v524
    %v555 = vperm.slane %v546, 0
    %v560 = vunpack.c.l.b16 %v526
    %v561 = vunpack.c.l.b16 %v527
    %v562 = vunpack.c.l.b16 %v528
    %v563 = vunpack.c.l.b16 %v529
    %v564 = vpack.c.b16 %v561, %v560
    %v565 = vpack.c.b16 %v563, %v562
    %v569 = vsel %vm20, %v554, 0
    %571 = vmatpush.bf16.msra.mxu0 0
    %572 = vmatpush.bf16.msra.mxu0 0
    %573 = vmatpush.bf16.msra.mxu0 0
    %574 = vmatpush.bf16.msra.mxu0 0
    %575 = vmatpush.bf16.msra.mxu0 0
    %576 = vmatpush.bf16.msra.mxu0 0
    %577 = vmatpush.bf16.msra.mxu0 %v565
    %578 = vmatpush.bf16.msra.mxu0 %v564
    %579 = vmatmul.bf16.gmra.mxu0 %v569
    %v580 = vpop.f32.mrf.mxu0
    %v581 = vadd.f32 %v555, %v580
    %v582 = vpop.f32.mrf.mxu0
    %v583 = vadd.f32 %v555, %v582
    %584 = vdwg.mxu0
    %v585 = vpack.c.bf16 %v583, %v581
    %587 = vrot.lane.b32.xlu0 %v585, 96
    %v588 = vpop.permute.xlu0 %587
    %v590 = vsel %vm141, %v585, 0
    %v593 = vsel %vm141, %v588, 0
    %595 = vmatpush.bf16.xpose.msra.mxu0 0
    %596 = vmatpush.bf16.xpose.msra.mxu0 0
    %597 = vmatpush.bf16.xpose.msra.mxu0 0
    %598 = vmatpush.bf16.xpose.msra.mxu0 0
    %599 = vmatpush.bf16.xpose.msra.mxu0 0
    %600 = vmatpush.bf16.xpose.msra.mxu0 0
    %601 = vmatpush.bf16.xpose.msra.mxu0 0
    %602 = vmatpush.bf16.xpose.msra.mxu0 %v593
    %603 = vmatmul.bf16.gmra.mxu0 %v590
    %v604 = vpop.f32.mrf.mxu0
    %v605 = vadd.f32 0.0, %v604
    %v606 = vpop.f32.mrf.mxu0
    %v607 = vadd.f32 0.0, %v606
    %608 = vdwg.mxu0
    %v609 = vmul.f32 %v605, 0.25
    %v610 = vmul.f32 %v607, 0.25
    %v611 = vadd.f32 %v609, %v167
    %v612 = vadd.f32 %v610, %v169
    %v613 = vsel %vm141, %v611, -inf
    %614 = vmax.xlane.f32.xlu0 %v613
    %v615 = vpop.xlane.xlu0 %614
    %v616 = vsel %vm141, %v612, -inf
    %617 = vmax.xlane.f32.xlu0 %v616
    %v618 = vpop.xlane.xlu0 %617
    %v619 = vsub.f32 %v611, %v615
    %v620 = vsub.f32 %v612, %v618
    %v621 = vmul.f32 %v619, 1.442695
    %v622 = vpow.pop %v621
    %v623 = vmul.f32 %v620, 1.442695
    %v624 = vpow.pop %v623
    %v625 = vsel %vm141, %v622, 0.0
    %626 = vadd.xlane.f32.xlu0 %v625
    %v627 = vpop.xlane.xlu0 %626
    %v628 = vsel %vm141, %v624, 0.0
    %629 = vadd.xlane.f32.xlu0 %v628
    %v630 = vpop.xlane.xlu0 %629
    %v631 = vrcp.pop %v627
    %v632 = vrcp.pop %v630
    %v633 = vmul.f32 %v622, %v631
    %v634 = vmul.f32 %v624, %v632
    %v635 = vpack.c.bf16 %v634, %v633
    %636 = vrot.lane.b32.xlu0 %v585, 64
    %v637 = vpop.permute.xlu0 %636
    %v640 = vsel %vm141, %v635, 0
    %642 = vmatpush.bf16.msra.mxu0 0
    %643 = vmatpush.bf16.msra.mxu0 0
    %644 = vmatpush.bf16.msra.mxu0 0
    %645 = vmatpush.bf16.msra.mxu0 0
    %646 = vmatpush.bf16.msra.mxu0 0
    %647 = vmatpush.bf16.msra.mxu0 0
    %648 = vmatpush.bf16.msra.mxu0 0
    %649 = vmatpush.bf16.msra.mxu0 %v637
    %650 = vmatmul.bf16.gmra.mxu0 %v640
    %v651 = vpop.f32.mrf.mxu0
    %v652 = vadd.f32 0.0, %v651
    %v653 = vpop.f32.mrf.mxu0
    %v654 = vadd.f32 0.0, %v653
    %655 = vdwg.mxu0
    %656 = vrot.lane.b32.xlu0 %v585, 112
    %v657 = vpop.permute.xlu0 %656
    %658 = vrot.lane.b32.xlu0 %v585, 80
    %v659 = vpop.permute.xlu0 %658
    %v661 = vsel %vm141, %v657, 0
    %v664 = vsel %vm141, %v659, 0
    %666 = vmatpush.bf16.xpose.msra.mxu0 0
    %667 = vmatpush.bf16.xpose.msra.mxu0 0
    %668 = vmatpush.bf16.xpose.msra.mxu0 0
    %669 = vmatpush.bf16.xpose.msra.mxu0 0
    %670 = vmatpush.bf16.xpose.msra.mxu0 0
    %671 = vmatpush.bf16.xpose.msra.mxu0 0
    %672 = vmatpush.bf16.xpose.msra.mxu0 0
    %673 = vmatpush.bf16.xpose.msra.mxu0 %v664
    %674 = vmatmul.bf16.gmra.mxu0 %v661
    %v675 = vpop.f32.mrf.mxu0
    %v676 = vadd.f32 0.0, %v675
    %v677 = vpop.f32.mrf.mxu0
    %v678 = vadd.f32 0.0, %v677
    %679 = vdwg.mxu0
    %v680 = vmul.f32 %v676, 0.25
    %v681 = vmul.f32 %v678, 0.25
    %v682 = vadd.f32 %v680, %v167
    %v683 = vadd.f32 %v681, %v169
    %v684 = vsel %vm141, %v682, -inf
    %685 = vmax.xlane.f32.xlu0 %v684
    %v686 = vpop.xlane.xlu0 %685
    %v687 = vsel %vm141, %v683, -inf
    %688 = vmax.xlane.f32.xlu0 %v687
    %v689 = vpop.xlane.xlu0 %688
    %v690 = vsub.f32 %v682, %v686
    %v691 = vsub.f32 %v683, %v689
    %v692 = vmul.f32 %v690, 1.442695
    %v693 = vpow.pop %v692
    %v694 = vmul.f32 %v691, 1.442695
    %v695 = vpow.pop %v694
    %v696 = vsel %vm141, %v693, 0.0
    %697 = vadd.xlane.f32.xlu0 %v696
    %v698 = vpop.xlane.xlu0 %697
    %v699 = vsel %vm141, %v695, 0.0
    %700 = vadd.xlane.f32.xlu0 %v699
    %v701 = vpop.xlane.xlu0 %700
    %v702 = vrcp.pop %v698
    %v703 = vrcp.pop %v701
    %v704 = vmul.f32 %v693, %v702
    %v705 = vmul.f32 %v695, %v703
    %v706 = vpack.c.bf16 %v705, %v704
    %707 = vrot.lane.b32.xlu0 %v585, 48
    %v708 = vpop.permute.xlu0 %707
    %v711 = vsel %vm141, %v706, 0
    %713 = vmatpush.bf16.msra.mxu0 0
    %714 = vmatpush.bf16.msra.mxu0 0
    %715 = vmatpush.bf16.msra.mxu0 0
    %716 = vmatpush.bf16.msra.mxu0 0
    %717 = vmatpush.bf16.msra.mxu0 0
    %718 = vmatpush.bf16.msra.mxu0 0
    %719 = vmatpush.bf16.msra.mxu0 0
    %720 = vmatpush.bf16.msra.mxu0 %v708
    %721 = vmatmul.bf16.gmra.mxu0 %v711
    %v722 = vpop.f32.mrf.mxu0
    %v723 = vadd.f32 0.0, %v722
    %v724 = vpop.f32.mrf.mxu0
    %v725 = vadd.f32 0.0, %v724
    %726 = vdwg.mxu0
    %729 = vrot.lane.b32.xlu0 %v723, 16
    %v730 = vpop.permute.xlu0 %729
    %731 = vrot.lane.b32.xlu0 %v725, 16
    %v732 = vpop.permute.xlu0 %731
    %v735 = vsel %vm141, %v652, %v730
    %v736 = vsel %vm141, %v654, %v732
    %v737 = vpack.c.bf16 %v736, %v735
    %v738 = vperm.slane %v547, 0
    %v743 = vunpack.c.l.b16 %v530
    %v744 = vunpack.c.l.b16 %v531
    %v745 = vunpack.c.l.b16 %v532
    %v746 = vunpack.c.l.b16 %v533
    %v747 = vpack.c.b16 %v744, %v743
    %v748 = vpack.c.b16 %v746, %v745
    %v752 = vsel %vm20, %v737, 0
    %754 = vmatpush.bf16.msra.mxu0 0
    %755 = vmatpush.bf16.msra.mxu0 0
    %756 = vmatpush.bf16.msra.mxu0 0
    %757 = vmatpush.bf16.msra.mxu0 0
    %758 = vmatpush.bf16.msra.mxu0 0
    %759 = vmatpush.bf16.msra.mxu0 0
    %760 = vmatpush.bf16.msra.mxu0 %v748
    %761 = vmatpush.bf16.msra.mxu0 %v747
    %762 = vmatmul.bf16.gmra.mxu0 %v752
    %v763 = vpop.f32.mrf.mxu0
    %v764 = vadd.f32 %v738, %v763
    %v765 = vpop.f32.mrf.mxu0
    %v766 = vadd.f32 %v738, %v765
    %767 = vdwg.mxu0
    %v768 = vadd.f32 %v524, %v764
    %v769 = vadd.f32 %v525, %v766
    %v770 = vsel %vm20, %v768, 0.0
    %771 = vadd.xlane.f32.xlu0 %v770
    %v772 = vpop.xlane.xlu0 %771
    %v773 = vsel %vm20, %v769, 0.0
    %774 = vadd.xlane.f32.xlu0 %v773
    %v775 = vpop.xlane.xlu0 %774
    %v776 = vmul.f32 %v772, %v33
    %v777 = vmul.f32 %v775, %v33
    %v778 = vsub.f32 %v768, %v776
    %v779 = vsub.f32 %v769, %v777
    %v780 = vmul.f32 %v778, %v778
    %v781 = vmul.f32 %v779, %v779
    %v782 = vsel %vm20, %v780, 0.0
    %783 = vadd.xlane.f32.xlu0 %v782
    %v784 = vpop.xlane.xlu0 %783
    %v785 = vsel %vm20, %v781, 0.0
    %786 = vadd.xlane.f32.xlu0 %v785
    %v787 = vpop.xlane.xlu0 %786
    %v788 = vmul.f32 %v784, %v33
    %v789 = vmul.f32 %v787, %v33
    %v790 = vadd.f32 %v788, 1e-12
    %v791 = vadd.f32 %v789, 1e-12
    %v792 = vrsqrt.pop %v790
    %v793 = vmul.f32 %v792, %v790
    %v794 = vmul.f32 %v793, %v792
    %v795 = vmul.f32 0.5, %v794
    %v796 = vsub.f32 1.5, %v795
    %v797 = vmul.f32 %v792, %v796
    %vm798 = vweird.f32 %v790
    %vm799 = vweird.f32 %v792
    %vm800 = vmor %vm798, %vm799
    %v801 = vsel %vm800, %v792, %v797
    %v802 = vrsqrt.pop %v791
    %v803 = vmul.f32 %v802, %v791
    %v804 = vmul.f32 %v803, %v802
    %v805 = vmul.f32 0.5, %v804
    %v806 = vsub.f32 1.5, %v805
    %v807 = vmul.f32 %v802, %v806
    %vm808 = vweird.f32 %v791
    %vm809 = vweird.f32 %v802
    %vm810 = vmor %vm808, %vm809
    %v811 = vsel %vm810, %v802, %v807
    %v812 = vmul.f32 %v778, %v801
    %v813 = vmul.f32 %v779, %v811
    %v814 = vperm.slane %v548, 0
    %v815 = vmul.f32 %v812, %v814
    %v816 = vmul.f32 %v813, %v814
    %v817 = vperm.slane %v549, 0
    %v818 = vadd.f32 %v815, %v817
    %v819 = vadd.f32 %v816, %v817
    %v820 = vpack.c.bf16 %v819, %v818
    %v821 = vperm.slane %v550, 0
    %v826 = vunpack.c.l.b16 %v534
    %v827 = vunpack.c.l.b16 %v535
    %v828 = vunpack.c.l.b16 %v536
    %v829 = vunpack.c.l.b16 %v537
    %v830 = vpack.c.b16 %v827, %v826
    %v831 = vpack.c.b16 %v829, %v828
    %v835 = vsel %vm20, %v820, 0
    %837 = vmatpush.bf16.msra.mxu0 0
    %838 = vmatpush.bf16.msra.mxu0 0
    %839 = vmatpush.bf16.msra.mxu0 0
    %840 = vmatpush.bf16.msra.mxu0 0
    %841 = vmatpush.bf16.msra.mxu0 0
    %842 = vmatpush.bf16.msra.mxu0 0
    %843 = vmatpush.bf16.msra.mxu0 %v831
    %844 = vmatpush.bf16.msra.mxu0 %v830
    %845 = vmatmul.bf16.gmra.mxu0 %v835
    %v846 = vpop.f32.mrf.mxu0
    %v847 = vadd.f32 %v821, %v846
    %v848 = vpop.f32.mrf.mxu0
    %v849 = vadd.f32 %v821, %v848
    %850 = vdwg.mxu0
    %v851 = vmul.f32 %v847, 0.5
    %v852 = vmul.f32 %v849, 0.5
    %v853 = vmul.f32 %v847, 0.044715
    %v854 = vmul.f32 %v849, 0.044715
    %v855 = vmul.f32 %v853, %v847
    %v856 = vmul.f32 %v854, %v849
    %v857 = vmul.f32 %v855, %v847
    %v858 = vmul.f32 %v856, %v849
    %v859 = vadd.f32 %v847, %v857
    %v860 = vadd.f32 %v849, %v858
    %v861 = vmul.f32 %v859, 0.7978846
    %v862 = vmul.f32 %v860, 0.7978846
    %v863 = vtanh.pop %v861
    %v864 = vtanh.pop %v862
    %v865 = vadd.f32 %v863, 1.0
    %v866 = vadd.f32 %v864, 1.0
    %v867 = vmul.f32 %v851, %v865
    %v868 = vmul.f32 %v852, %v866
    %v869 = vpack.c.bf16 %v868, %v867
    %v870 = vperm.slane %v551, 0
    %v879 = vunpack.c.l.b16 %v538
    %v880 = vunpack.c.l.b16 %v539
    %v881 = vunpack.c.l.b16 %v540
    %v882 = vunpack.c.l.b16 %v541
    %v883 = vunpack.c.l.b16 %v542
    %v884 = vunpack.c.l.b16 %v543
    %v885 = vunpack.c.l.b16 %v544
    %v886 = vunpack.c.l.b16 %v545
    %v887 = vpack.c.b16 %v880, %v879
    %v888 = vpack.c.b16 %v882, %v881
    %v889 = vpack.c.b16 %v884, %v883
    %v890 = vpack.c.b16 %v886, %v885
    %v896 = vsel %vm456, %v869, 0
    %898 = vmatpush.bf16.msra.mxu0 0
    %899 = vmatpush.bf16.msra.mxu0 0
    %900 = vmatpush.bf16.msra.mxu0 0
    %901 = vmatpush.bf16.msra.mxu0 0
    %902 = vmatpush.bf16.msra.mxu0 %v890
    %903 = vmatpush.bf16.msra.mxu0 %v889
    %904 = vmatpush.bf16.msra.mxu0 %v888
    %905 = vmatpush.bf16.msra.mxu0 %v887
    %906 = vmatmul.bf16.gmra.mxu0 %v896
    %v907 = vpop.f32.mrf.mxu0
    %v908 = vadd.f32 %v870, %v907
    %v909 = vpop.f32.mrf.mxu0
    %v910 = vadd.f32 %v870, %v909
    %911 = vdwg.mxu0
    %v912 = vadd.f32 %v818, %v908
    %v913 = vadd.f32 %v819, %v910
    %v914 = vsel %vm20, %v912, 0.0
    %915 = vadd.xlane.f32.xlu0 %v914
    %v916 = vpop.xlane.xlu0 %915
    %v917 = vsel %vm20, %v913, 0.0
    %918 = vadd.xlane.f32.xlu0 %v917
    %v919 = vpop.xlane.xlu0 %918
    %v920 = vmul.f32 %v916, %v33
    %v921 = vmul.f32 %v919, %v33
    %v922 = vsub.f32 %v912, %v920
    %v923 = vsub.f32 %v913, %v921
    %v924 = vmul.f32 %v922, %v922
    %v925 = vmul.f32 %v923, %v923
    %v926 = vsel %vm20, %v924, 0.0
    %927 = vadd.xlane.f32.xlu0 %v926
    %v928 = vpop.xlane.xlu0 %927
    %v929 = vsel %vm20, %v925, 0.0
    %930 = vadd.xlane.f32.xlu0 %v929
    %v931 = vpop.xlane.xlu0 %930
    %v932 = vmul.f32 %v928, %v33
    %v933 = vmul.f32 %v931, %v33
    %v934 = vadd.f32 %v932, 1e-12
    %v935 = vadd.f32 %v933, 1e-12
    %v936 = vrsqrt.pop %v934
    %v937 = vmul.f32 %v936, %v934
    %v938 = vmul.f32 %v937, %v936
    %v939 = vmul.f32 0.5, %v938
    %v940 = vsub.f32 1.5, %v939
    %v941 = vmul.f32 %v936, %v940
    %vm942 = vweird.f32 %v934
    %vm943 = vweird.f32 %v936
    %vm944 = vmor %vm942, %vm943
    %v945 = vsel %vm944, %v936, %v941
    %v946 = vrsqrt.pop %v935
    %v947 = vmul.f32 %v946, %v935
    %v948 = vmul.f32 %v947, %v946
    %v949 = vmul.f32 0.5, %v948
    %v950 = vsub.f32 1.5, %v949
    %v951 = vmul.f32 %v946, %v950
    %vm952 = vweird.f32 %v935
    %vm953 = vweird.f32 %v946
    %vm954 = vmor %vm952, %vm953
    %v955 = vsel %vm954, %v946, %v951
    %v956 = vmul.f32 %v922, %v945
    %v957 = vmul.f32 %v923, %v955
    %v958 = vperm.slane %v552, 0
    %v959 = vmul.f32 %v956, %v958
    %v960 = vmul.f32 %v957, %v958
    %v961 = vperm.slane %v553, 0
    %v962 = vadd.f32 %v959, %v961
    %v963 = vadd.f32 %v960, %v961
    %v964 = vld [vmem:[%s1 + $0xa0] sm:$0xf]
    %v965 = vld [vmem:[%s1 + $0xa4] sm:$0xf]
    %v966 = vld [vmem:[%s1 + $0xa8] sm:$0xf]
    %v967 = vld [vmem:[%s1 + $0xac] sm:$0xf]
    %v968 = vld [vmem:[%s2 + $0x12] sm:$0x1]
    %v969 = vpack.c.bf16 %v963, %v962
    %v970 = vperm.slane %v968, 0
    %v975 = vunpack.c.l.b16 %v964
    %v976 = vunpack.c.l.b16 %v965
    %v977 = vunpack.c.l.b16 %v966
    %v978 = vunpack.c.l.b16 %v967
    %v979 = vpack.c.b16 %v976, %v975
    %v980 = vpack.c.b16 %v978, %v977
    %v984 = vsel %vm20, %v969, 0
    %986 = vmatpush.bf16.msra.mxu0 0
    %987 = vmatpush.bf16.msra.mxu0 0
    %988 = vmatpush.bf16.msra.mxu0 0
    %989 = vmatpush.bf16.msra.mxu0 0
    %990 = vmatpush.bf16.msra.mxu0 0
    %991 = vmatpush.bf16.msra.mxu0 0
    %992 = vmatpush.bf16.msra.mxu0 %v980
    %993 = vmatpush.bf16.msra.mxu0 %v979
    %994 = vmatmul.bf16.gmra.mxu0 %v984
    %v995 = vpop.f32.mrf.mxu0
    %v996 = vadd.f32 %v970, %v995
    %v997 = vpop.f32.mrf.mxu0
    %v998 = vadd.f32 %v970, %v997
    %999 = vdwg.mxu0
    %vm1000 = vcmask 97280
    %1001 = vst.msk [vmem:[#allocation2] sm:$0xff] %vm1000, %v996
    %1002 = vst.msk [vmem:[#allocation2 + $0x8] sm:$0xff] %vm1000, %v998
    // Predicated region
    $region14: #{tpu_custom_call.1} parent=1 // pred_check
      _
    $region15: #{tpu_custom_call.1} parent=1 // pred_check_branch
      %1004 = sbr.rel (0) target = $region17
    $region16: #{tpu_custom_call.1} parent=1 // pred_region
      %1006 = vsyncadd [#allocation3], 0
      %s1007 = sshll.u32 [#allocation2], 4
      %s1008 = int_to_ptr.vmem [resolvable:$true] %s1007
      %s1009 = sshll.u32 %s3, 4
      %s1010 = int_to_ptr.hbm [resolvable:$true] %s1009
      %1015 = dma.vmem_to_hbm [thread:$0]  %s1008, 256, %s1010, [#allocation3], 128, 128, 8
    $region17: #{tpu_custom_call.1} parent=1 // pred_fallthru
      _
    // Predicated region
    $region18: #{tpu_custom_call.1} parent=1 // pred_check
      _
    $region19: #{tpu_custom_call.1} parent=1 // pred_check_branch
      %1017 = sbr.rel (0) target = $region21
    $region20: #{tpu_custom_call.1} parent=1 // pred_region
      %1019 = dma.done [#allocation3], 256
    $region21: #{tpu_custom_call.1} parent=1 // pred_fallthru
      _
    %1020 = vsyncpa [#allocation3], 1

</llo_original>
